<compile_context>
chip_gen: v6e
topology: v6e:2x2x1
jax: 0.10.0
libtpu: 0.0.40
codegen_flags: <defaults>
</compile_context>

<pallas_src>
import jax
import jax.numpy as jnp
from jax.experimental import pallas as pl
from jax.experimental.pallas import tpu as pltpu


def _round_up(x, m):
    return (x + m - 1) // m * m


def _label_encoder_kernel(tok_ref,      # VMEM (TB, NL) int32, per-tile token ids
                          table_ref,    # VMEM (Vp, Hp) bf16, concatenated tables
                          w_fc_ref,     # VMEM (Hp, Hp) bf16, fc weight (transposed)
                          b_fc_ref,     # VMEM (1, Hp)  f32
                          w_head_ref,   # VMEM (Hp, P)  bf16, [mu | var | 0-pad]
                          b_head_ref,   # VMEM (1, P)   f32
                          out_ref):     # VMEM (TB, P)  f32, lane-dense output slab
    TB, NL = tok_ref.shape
    Vp = table_ref.shape[0]

    # Multi-hot count matrix (TB, Vp): how many of this row's NL labels hit
    # each (offset) vocab id.  Counts are tiny integers -> exact in bf16.
    ids = tok_ref[...]                                           # (TB, NL)
    vocab = jax.lax.broadcasted_iota(jnp.int32, (TB, Vp), 1)
    counts = jnp.zeros((TB, Vp), jnp.float32)
    for i in range(NL):                                          # NL small & static
        counts = counts + (vocab == ids[:, i:i + 1]).astype(jnp.float32)

    # Embedding sum as one MXU dot: (TB, Vp) @ (Vp, Hp), f32 accumulate.
    h = jnp.dot(counts.astype(jnp.bfloat16), table_ref[...],
                preferred_element_type=jnp.float32)

    # fc + ReLU (bf16 MXU feed, f32 accumulate & elementwise).
    h = jnp.dot(h.astype(jnp.bfloat16), w_fc_ref[...],
                preferred_element_type=jnp.float32)
    h = jnp.maximum(h + b_fc_ref[...], 0.0)

    # Fused mu / log_var head -> single lane-dense unmasked store.
    out = jnp.dot(h.astype(jnp.bfloat16), w_head_ref[...],
                  preferred_element_type=jnp.float32)
    out_ref[...] = out + b_head_ref[...]


def label_encoder_forward(x_tokens, params, latent_size, block_b=None):
    """x_tokens: (B, NL) integer labels; returns (mu, log_var), each (B, latent_size)."""
    B, NL = x_tokens.shape
    Vp, Hp = params["table"].shape
    P = params["w_head_t"].shape[1]
    L = latent_size

    if block_b is None:
        # >=2 grid steps when possible (megacore on v7x), 8-row aligned, <=256 rows.
        block_b = min(256, max(8, _round_up((B + 1) // 2, 8)))
    TB = max(8, _round_up(block_b, 8))
    grid_b = pl.cdiv(B, TB)
    B_pad = grid_b * TB

    # Glue: shift each label column into its slice of the concatenated vocab,
    # pad the batch to a multiple of the tile (pad rows are sliced off below).
    tok_global = x_tokens.astype(jnp.int32) + params["offsets"][None, :]
    if B_pad != B:
        tok_global = jnp.pad(tok_global, ((0, B_pad - B), (0, 0)))

    def build(single_buffer_consts):
        def const_spec(shape):
            if single_buffer_consts:
                return pl.BlockSpec(shape, lambda bi: (0, 0),
                                    pipeline_mode=pl.Buffered(1))
            return pl.BlockSpec(shape, lambda bi: (0, 0))

        nbuf_c = 1 if single_buffer_consts else 2
        const_bytes = (Vp * Hp * 2 + Hp * Hp * 2 + Hp * 4 + Hp * P * 2 + P * 4) * nbuf_c
        stream_bytes = 2 * (TB * 128 * 4 + TB * P * 4)       # tok + out tiles, 2-deep
        work_bytes = TB * (Vp + 2 * Hp + P) * 4               # in-kernel working set
        vmem_limit = int(min(48 << 20,
                             max(8 << 20, 2 * (const_bytes + stream_bytes + work_bytes))))

        return pl.pallas_call(
            _label_encoder_kernel,
            out_shape=jax.ShapeDtypeStruct((B_pad, P), jnp.float32),
            grid_spec=pltpu.PrefetchScalarGridSpec(
                num_scalar_prefetch=0,
                grid=(grid_b,),
                in_specs=[
                    pl.BlockSpec((TB, NL), lambda bi: (bi, 0)),   # token ids per tile
                    const_spec((Vp, Hp)),                         # embedding table (resident)
                    const_spec((Hp, Hp)),                         # fc weight (bf16)
                    const_spec((1, Hp)),                          # fc bias
                    const_spec((Hp, P)),                          # fused mu|var weight (bf16)
                    const_spec((1, P)),                           # fused mu|var bias
                ],
                out_specs=pl.BlockSpec((TB, P), lambda bi: (bi, 0)),
            ),
            compiler_params=pltpu.CompilerParams(
                dimension_semantics=("parallel",),                # batch tiles shard across TCs
                vmem_limit_bytes=vmem_limit),
        )

    args = (tok_global, params["table"], params["w_fc_t"], params["b_fc"],
            params["w_head_t"], params["b_head"])
    try:
        out = build(single_buffer_consts=True)(*args)
    except Exception:
        # Installed jax/pallas without pipeline_mode=pl.Buffered support.
        out = build(single_buffer_consts=False)(*args)

    return out[:B, :L], out[:B, L:2 * L]


def init_params(key, label_embed_sizes, hidden_size, latent_size):
    """Deterministic synthetic init mirroring nn.Embedding / nn.Linear shapes,
    with all feature dims zero-padded to 128 lanes and weights stored in bf16."""
    ks = jax.random.split(key, 4)
    H, L = hidden_size, latent_size
    Hp = _round_up(max(H, 1), 128)
    P = _round_up(max(2 * L, 1), 128)

    tables = [jax.random.normal(jax.random.fold_in(ks[0], i), (s, H), jnp.float32) * 0.1
              for i, s in enumerate(label_embed_sizes)]
    table = jnp.concatenate(tables, axis=0)                   # (V_total, H)
    V = table.shape[0]
    Vp = _round_up(V, 8)
    table_p = jnp.zeros((Vp, Hp), jnp.float32).at[:V, :H].set(table)

    offs, acc = [], 0
    for s in label_embed_sizes:
        offs.append(acc)
        acc += s
    offsets = jnp.array(offs, dtype=jnp.int32)

    def linear(k, out_f, in_f):
        kw, kb = jax.random.split(k)
        w = jax.random.normal(kw, (out_f, in_f), jnp.float32) * 0.05   # (out, in)
        b = jax.random.normal(kb, (out_f,), jnp.float32) * 0.05
        return w, b

    w_fc, b_fc = linear(ks[1], H, H)
    w_mu, b_mu = linear(ks[2], L, H)
    w_var, b_var = linear(ks[3], L, H)

    w_fc_t = jnp.zeros((Hp, Hp), jnp.float32).at[:H, :H].set(w_fc.T)
    b_fc_p = jnp.zeros((1, Hp), jnp.float32).at[:, :H].set(b_fc[None, :])

    # Fused, lane-padded head: columns [0:L]=mu, [L:2L]=log_var, rest zero.
    w_head_t = jnp.zeros((Hp, P), jnp.float32)
    w_head_t = w_head_t.at[:H, :L].set(w_mu.T).at[:H, L:2 * L].set(w_var.T)
    b_head = jnp.zeros((1, P), jnp.float32)
    b_head = b_head.at[:, :L].set(b_mu[None, :]).at[:, L:2 * L].set(b_var[None, :])

    return {
        "table": table_p.astype(jnp.bfloat16),    # (Vp, Hp) bf16 concatenated tables
        "offsets": offsets,                       # (NL,) int32 vocab offsets
        "w_fc_t": w_fc_t.astype(jnp.bfloat16),    # (Hp, Hp) bf16
        "b_fc": b_fc_p,                           # (1, Hp)  f32
        "w_head_t": w_head_t.astype(jnp.bfloat16),  # (Hp, P) bf16
        "b_head": b_head,                         # (1, P)   f32
    }


def reference_forward(x_tokens, params, latent_size):
    """Pure-JAX reference reproducing the PyTorch module semantics."""
    L = latent_size
    tok = x_tokens.astype(jnp.int32) + params["offsets"][None, :]
    rows = params["table"][tok]                               # (B, NL, Hp) gather
    h = rows.astype(jnp.float32).sum(axis=1)                  # stack(...).sum(-1)
    h = jnp.dot(h.astype(jnp.bfloat16), params["w_fc_t"],
                preferred_element_type=jnp.float32) + params["b_fc"]
    h = jnp.maximum(h, 0.0)
    out = jnp.dot(h.astype(jnp.bfloat16), params["w_head_t"],
                  preferred_element_type=jnp.float32) + params["b_head"]
    return out[:, :L], out[:, L:2 * L]


if __name__ == "__main__":
    label_embed_sizes = [5, 7, 3]     # NL = 3 labels, V_total = 15
    hidden_size = 32
    latent_size = 16
    B = 20                            # not a multiple of the tile -> exercises pad path

    key = jax.random.PRNGKey(0)
    kp, kx = jax.random.split(key)
    params = init_params(kp, label_embed_sizes, hidden_size, latent_size)

    cols = [jax.random.randint(jax.random.fold_in(kx, i), (B, 1), 0, s)
            for i, s in enumerate(label_embed_sizes)]
    x = jnp.concatenate(cols, axis=1).astype(jnp.int32)       # (B, NL)

    mu, log_var = label_encoder_forward(x, params, latent_size, block_b=8)
    jax.block_until_ready((mu, log_var))

    mu_ref, lv_ref = reference_forward(x, params, latent_size)
    assert mu.shape == (B, latent_size) and log_var.shape == (B, latent_size)
    assert jnp.allclose(mu, mu_ref, atol=2e-3, rtol=2e-3), "mu mismatch"
    assert jnp.allclose(log_var, lv_ref, atol=2e-3, rtol=2e-3), "log_var mismatch"

    print("KERNEL_OK")
</pallas_src>

<mosaic_0001>
module attributes {stable_mosaic.version = 11 : i64} {
  func.func @_label_encoder_kernel(%arg0: i32, %arg1: memref<8x3xi32, #tpu.memory_space<vmem>>, %arg2: memref<16x128xbf16, #tpu.memory_space<vmem>>, %arg3: memref<128x128xbf16, #tpu.memory_space<vmem>>, %arg4: memref<1x128xf32, #tpu.memory_space<vmem>>, %arg5: memref<128x128xbf16, #tpu.memory_space<vmem>>, %arg6: memref<1x128xf32, #tpu.memory_space<vmem>>, %arg7: memref<8x128xf32, #tpu.memory_space<vmem>>) attributes {dimension_semantics = [#tpu.dimension_semantics<parallel>], iteration_bounds = array<i64: 3>, scalar_prefetch = 0 : i64, scratch_operands = 0 : i64, tpu.core_type = #tpu.core_type<tc>, window_params = [{transform_indices = @transform_0, window_bounds = array<i64: 8, 3>}, {pipeline_mode = #tpu.pipeline_mode<synchronous>, transform_indices = @transform_1, window_bounds = array<i64: 16, 128>}, {pipeline_mode = #tpu.pipeline_mode<synchronous>, transform_indices = @transform_2, window_bounds = array<i64: 128, 128>}, {pipeline_mode = #tpu.pipeline_mode<synchronous>, transform_indices = @transform_3, window_bounds = array<i64: 1, 128>}, {pipeline_mode = #tpu.pipeline_mode<synchronous>, transform_indices = @transform_4, window_bounds = array<i64: 128, 128>}, {pipeline_mode = #tpu.pipeline_mode<synchronous>, transform_indices = @transform_5, window_bounds = array<i64: 1, 128>}, {transform_indices = @transform_6, window_bounds = array<i64: 8, 128>}]} {
    %c0 = arith.constant 0 : index
    %c0_0 = arith.constant 0 : index
    %0 = vector.load %arg1[%c0, %c0_0] : memref<8x3xi32, #tpu.memory_space<vmem>>, vector<8x3xi32>
    %1 = tpu.iota {dimensions = array<i32: 1>} : vector<8x16xi32>
    %cst = arith.constant 0.000000e+00 : f32
    %2 = vector.broadcast %cst : f32 to vector<8x16xf32>
    %3 = vector.extract_strided_slice %0 {offsets = [0, 0], sizes = [8, 1], strides = [1, 1]} : vector<8x3xi32> to vector<8x1xi32>
    %4 = vector.broadcast %3 : vector<8x1xi32> to vector<8x16xi32>
    %5 = arith.cmpi eq, %1, %4 : vector<8x16xi32>
    %6 = arith.extui %5 : vector<8x16xi1> to vector<8x16xi32>
    %7 = arith.sitofp %6 : vector<8x16xi32> to vector<8x16xf32>
    %8 = arith.addf %2, %7 : vector<8x16xf32>
    %9 = vector.extract_strided_slice %0 {offsets = [0, 1], sizes = [8, 1], strides = [1, 1]} : vector<8x3xi32> to vector<8x1xi32>
    %10 = vector.broadcast %9 : vector<8x1xi32> to vector<8x16xi32>
    %11 = arith.cmpi eq, %1, %10 : vector<8x16xi32>
    %12 = arith.extui %11 : vector<8x16xi1> to vector<8x16xi32>
    %13 = arith.sitofp %12 : vector<8x16xi32> to vector<8x16xf32>
    %14 = arith.addf %8, %13 : vector<8x16xf32>
    %15 = vector.extract_strided_slice %0 {offsets = [0, 2], sizes = [8, 1], strides = [1, 1]} : vector<8x3xi32> to vector<8x1xi32>
    %16 = vector.broadcast %15 : vector<8x1xi32> to vector<8x16xi32>
    %17 = arith.cmpi eq, %1, %16 : vector<8x16xi32>
    %18 = arith.extui %17 : vector<8x16xi1> to vector<8x16xi32>
    %19 = arith.sitofp %18 : vector<8x16xi32> to vector<8x16xf32>
    %20 = arith.addf %14, %19 : vector<8x16xf32>
    %21 = arith.truncf %20 : vector<8x16xf32> to vector<8x16xbf16>
    %c0_1 = arith.constant 0 : index
    %c0_2 = arith.constant 0 : index
    %22 = vector.load %arg2[%c0_1, %c0_2] : memref<16x128xbf16, #tpu.memory_space<vmem>>, vector<16x128xbf16>
    %cst_3 = arith.constant dense<0.000000e+00> : vector<8x128xf32>
    %23 = tpu.matmul %21, %22, %cst_3 {dimension_numbers = #tpu.dot_dimension_numbers<[1], [0], [0], [1], [0, 0, 1, 1], [], []>} : vector<8x16xbf16>, vector<16x128xbf16>, vector<8x128xf32> -> vector<8x128xf32>
    %24 = arith.truncf %23 : vector<8x128xf32> to vector<8x128xbf16>
    %c0_4 = arith.constant 0 : index
    %c0_5 = arith.constant 0 : index
    %25 = vector.load %arg3[%c0_4, %c0_5] : memref<128x128xbf16, #tpu.memory_space<vmem>>, vector<128x128xbf16>
    %cst_6 = arith.constant dense<0.000000e+00> : vector<8x128xf32>
    %26 = tpu.matmul %24, %25, %cst_6 {dimension_numbers = #tpu.dot_dimension_numbers<[1], [0], [0], [1], [0, 0, 1, 1], [], []>} : vector<8x128xbf16>, vector<128x128xbf16>, vector<8x128xf32> -> vector<8x128xf32>
    %c0_7 = arith.constant 0 : index
    %c0_8 = arith.constant 0 : index
    %27 = vector.load %arg4[%c0_7, %c0_8] : memref<1x128xf32, #tpu.memory_space<vmem>>, vector<1x128xf32>
    %28 = vector.broadcast %27 : vector<1x128xf32> to vector<8x128xf32>
    %29 = arith.addf %26, %28 : vector<8x128xf32>
    %cst_9 = arith.constant 0.000000e+00 : f32
    %30 = vector.broadcast %cst_9 : f32 to vector<8x128xf32>
    %31 = arith.maximumf %29, %30 : vector<8x128xf32>
    %32 = arith.truncf %31 : vector<8x128xf32> to vector<8x128xbf16>
    %c0_10 = arith.constant 0 : index
    %c0_11 = arith.constant 0 : index
    %33 = vector.load %arg5[%c0_10, %c0_11] : memref<128x128xbf16, #tpu.memory_space<vmem>>, vector<128x128xbf16>
    %cst_12 = arith.constant dense<0.000000e+00> : vector<8x128xf32>
    %34 = tpu.matmul %32, %33, %cst_12 {dimension_numbers = #tpu.dot_dimension_numbers<[1], [0], [0], [1], [0, 0, 1, 1], [], []>} : vector<8x128xbf16>, vector<128x128xbf16>, vector<8x128xf32> -> vector<8x128xf32>
    %c0_13 = arith.constant 0 : index
    %c0_14 = arith.constant 0 : index
    %35 = vector.load %arg6[%c0_13, %c0_14] : memref<1x128xf32, #tpu.memory_space<vmem>>, vector<1x128xf32>
    %36 = vector.broadcast %35 : vector<1x128xf32> to vector<8x128xf32>
    %37 = arith.addf %34, %36 : vector<8x128xf32>
    %c0_15 = arith.constant 0 : index
    %c0_16 = arith.constant 0 : index
    %38 = vector.load %arg7[%c0_15, %c0_16] : memref<8x128xf32, #tpu.memory_space<vmem>>, vector<8x128xf32>
    tpu.vector_store %arg7[%c0_15, %c0_16], %37 {strides = array<i32>} : memref<8x128xf32, #tpu.memory_space<vmem>>, vector<8x128xf32>,
    return
  }
  func.func @transform_0(%arg0: i32) -> (i32, i32) {
    %c0_i32 = arith.constant 0 : i32
    %c0_i32_0 = arith.constant 0 : i32
    return %arg0, %c0_i32 : i32, i32
  }
  func.func @transform_1(%arg0: i32) -> (i32, i32) {
    %c0_i32 = arith.constant 0 : i32
    %c0_i32_0 = arith.constant 0 : i32
    %c0_i32_1 = arith.constant 0 : i32
    return %c0_i32, %c0_i32_0 : i32, i32
  }
  func.func @transform_2(%arg0: i32) -> (i32, i32) {
    %c0_i32 = arith.constant 0 : i32
    %c0_i32_0 = arith.constant 0 : i32
    %c0_i32_1 = arith.constant 0 : i32
    return %c0_i32, %c0_i32_0 : i32, i32
  }
  func.func @transform_3(%arg0: i32) -> (i32, i32) {
    %c0_i32 = arith.constant 0 : i32
    %c0_i32_0 = arith.constant 0 : i32
    %c0_i32_1 = arith.constant 0 : i32
    return %c0_i32, %c0_i32_0 : i32, i32
  }
  func.func @transform_4(%arg0: i32) -> (i32, i32) {
    %c0_i32 = arith.constant 0 : i32
    %c0_i32_0 = arith.constant 0 : i32
    %c0_i32_1 = arith.constant 0 : i32
    return %c0_i32, %c0_i32_0 : i32, i32
  }
  func.func @transform_5(%arg0: i32) -> (i32, i32) {
    %c0_i32 = arith.constant 0 : i32
    %c0_i32_0 = arith.constant 0 : i32
    %c0_i32_1 = arith.constant 0 : i32
    return %c0_i32, %c0_i32_0 : i32, i32
  }
  func.func @transform_6(%arg0: i32) -> (i32, i32) {
    %c0_i32 = arith.constant 0 : i32
    %c0_i32_0 = arith.constant 0 : i32
    return %arg0, %c0_i32 : i32, i32
  }
}

module attributes {stable_mosaic.version = 11 : i64} {
  func.func @_label_encoder_kernel(%arg0: i32, %arg1: memref<8x3xi32, #tpu.memory_space<vmem>>, %arg2: memref<16x128xbf16, #tpu.memory_space<vmem>>, %arg3: memref<128x128xbf16, #tpu.memory_space<vmem>>, %arg4: memref<1x128xf32, #tpu.memory_space<vmem>>, %arg5: memref<128x128xbf16, #tpu.memory_space<vmem>>, %arg6: memref<1x128xf32, #tpu.memory_space<vmem>>, %arg7: memref<8x128xf32, #tpu.memory_space<vmem>>) attributes {dimension_semantics = [#tpu.dimension_semantics<parallel>], iteration_bounds = array<i64: 3>, scalar_prefetch = 0 : i64, scratch_operands = 0 : i64, tpu.core_type = #tpu.core_type<tc>, window_params = [{transform_indices = @transform_0, window_bounds = array<i64: 8, 3>}, {pipeline_mode = #tpu.pipeline_mode<synchronous>, transform_indices = @transform_1, window_bounds = array<i64: 16, 128>}, {pipeline_mode = #tpu.pipeline_mode<synchronous>, transform_indices = @transform_2, window_bounds = array<i64: 128, 128>}, {pipeline_mode = #tpu.pipeline_mode<synchronous>, transform_indices = @transform_3, window_bounds = array<i64: 1, 128>}, {pipeline_mode = #tpu.pipeline_mode<synchronous>, transform_indices = @transform_4, window_bounds = array<i64: 128, 128>}, {pipeline_mode = #tpu.pipeline_mode<synchronous>, transform_indices = @transform_5, window_bounds = array<i64: 1, 128>}, {transform_indices = @transform_6, window_bounds = array<i64: 8, 128>}]} {
    %c0 = arith.constant 0 : index
    %c0_0 = arith.constant 0 : index
    %0 = vector.load %arg1[%c0, %c0_0] : memref<8x3xi32, #tpu.memory_space<vmem>>, vector<8x3xi32>
    %1 = tpu.iota {dimensions = array<i32: 1>} : vector<8x16xi32>
    %cst = arith.constant 0.000000e+00 : f32
    %2 = vector.broadcast %cst : f32 to vector<8x16xf32>
    %3 = vector.extract_strided_slice %0 {offsets = [0, 0], sizes = [8, 1], strides = [1, 1]} : vector<8x3xi32> to vector<8x1xi32>
    %4 = vector.broadcast %3 : vector<8x1xi32> to vector<8x16xi32>
    %5 = arith.cmpi eq, %1, %4 : vector<8x16xi32>
    %6 = arith.extui %5 : vector<8x16xi1> to vector<8x16xi32>
    %7 = arith.sitofp %6 : vector<8x16xi32> to vector<8x16xf32>
    %8 = arith.addf %2, %7 : vector<8x16xf32>
    %9 = vector.extract_strided_slice %0 {offsets = [0, 1], sizes = [8, 1], strides = [1, 1]} : vector<8x3xi32> to vector<8x1xi32>
    %10 = vector.broadcast %9 : vector<8x1xi32> to vector<8x16xi32>
    %11 = arith.cmpi eq, %1, %10 : vector<8x16xi32>
    %12 = arith.extui %11 : vector<8x16xi1> to vector<8x16xi32>
    %13 = arith.sitofp %12 : vector<8x16xi32> to vector<8x16xf32>
    %14 = arith.addf %8, %13 : vector<8x16xf32>
    %15 = vector.extract_strided_slice %0 {offsets = [0, 2], sizes = [8, 1], strides = [1, 1]} : vector<8x3xi32> to vector<8x1xi32>
    %16 = vector.broadcast %15 : vector<8x1xi32> to vector<8x16xi32>
    %17 = arith.cmpi eq, %1, %16 : vector<8x16xi32>
    %18 = arith.extui %17 : vector<8x16xi1> to vector<8x16xi32>
    %19 = arith.sitofp %18 : vector<8x16xi32> to vector<8x16xf32>
    %20 = arith.addf %14, %19 : vector<8x16xf32>
    %21 = arith.truncf %20 : vector<8x16xf32> to vector<8x16xbf16>
    %c0_1 = arith.constant 0 : index
    %c0_2 = arith.constant 0 : index
    %22 = vector.load %arg2[%c0_1, %c0_2] : memref<16x128xbf16, #tpu.memory_space<vmem>>, vector<16x128xbf16>
    %cst_3 = arith.constant dense<0.000000e+00> : vector<8x128xf32>
    %23 = tpu.matmul %21, %22, %cst_3 {dimension_numbers = #tpu.dot_dimension_numbers<[1], [0], [0], [1], [0, 0, 1, 1], [], []>} : vector<8x16xbf16>, vector<16x128xbf16>, vector<8x128xf32> -> vector<8x128xf32>
    %24 = arith.truncf %23 : vector<8x128xf32> to vector<8x128xbf16>
    %c0_4 = arith.constant 0 : index
    %c0_5 = arith.constant 0 : index
    %25 = vector.load %arg3[%c0_4, %c0_5] : memref<128x128xbf16, #tpu.memory_space<vmem>>, vector<128x128xbf16>
    %cst_6 = arith.constant dense<0.000000e+00> : vector<8x128xf32>
    %26 = tpu.matmul %24, %25, %cst_6 {dimension_numbers = #tpu.dot_dimension_numbers<[1], [0], [0], [1], [0, 0, 1, 1], [], []>} : vector<8x128xbf16>, vector<128x128xbf16>, vector<8x128xf32> -> vector<8x128xf32>
    %c0_7 = arith.constant 0 : index
    %c0_8 = arith.constant 0 : index
    %27 = vector.load %arg4[%c0_7, %c0_8] : memref<1x128xf32, #tpu.memory_space<vmem>>, vector<1x128xf32>
    %28 = vector.broadcast %27 : vector<1x128xf32> to vector<8x128xf32>
    %29 = arith.addf %26, %28 : vector<8x128xf32>
    %cst_9 = arith.constant 0.000000e+00 : f32
    %30 = vector.broadcast %cst_9 : f32 to vector<8x128xf32>
    %31 = arith.maximumf %29, %30 : vector<8x128xf32>
    %32 = arith.truncf %31 : vector<8x128xf32> to vector<8x128xbf16>
    %c0_10 = arith.constant 0 : index
    %c0_11 = arith.constant 0 : index
    %33 = vector.load %arg5[%c0_10, %c0_11] : memref<128x128xbf16, #tpu.memory_space<vmem>>, vector<128x128xbf16>
    %cst_12 = arith.constant dense<0.000000e+00> : vector<8x128xf32>
    %34 = tpu.matmul %32, %33, %cst_12 {dimension_numbers = #tpu.dot_dimension_numbers<[1], [0], [0], [1], [0, 0, 1, 1], [], []>} : vector<8x128xbf16>, vector<128x128xbf16>, vector<8x128xf32> -> vector<8x128xf32>
    %c0_13 = arith.constant 0 : index
    %c0_14 = arith.constant 0 : index
    %35 = vector.load %arg6[%c0_13, %c0_14] : memref<1x128xf32, #tpu.memory_space<vmem>>, vector<1x128xf32>
    %36 = vector.broadcast %35 : vector<1x128xf32> to vector<8x128xf32>
    %37 = arith.addf %34, %36 : vector<8x128xf32>
    %c0_15 = arith.constant 0 : index
    %c0_16 = arith.constant 0 : index
    %38 = vector.load %arg7[%c0_15, %c0_16] : memref<8x128xf32, #tpu.memory_space<vmem>>, vector<8x128xf32>
    tpu.vector_store %arg7[%c0_15, %c0_16], %37 {strides = array<i32>} : memref<8x128xf32, #tpu.memory_space<vmem>>, vector<8x128xf32>,
    return
  }
  func.func @transform_0(%arg0: i32) -> (i32, i32) {
    %c0_i32 = arith.constant 0 : i32
    %c0_i32_0 = arith.constant 0 : i32
    return %arg0, %c0_i32 : i32, i32
  }
  func.func @transform_1(%arg0: i32) -> (i32, i32) {
    %c0_i32 = arith.constant 0 : i32
    %c0_i32_0 = arith.constant 0 : i32
    %c0_i32_1 = arith.constant 0 : i32
    return %c0_i32, %c0_i32_0 : i32, i32
  }
  func.func @transform_2(%arg0: i32) -> (i32, i32) {
    %c0_i32 = arith.constant 0 : i32
    %c0_i32_0 = arith.constant 0 : i32
    %c0_i32_1 = arith.constant 0 : i32
    return %c0_i32, %c0_i32_0 : i32, i32
  }
  func.func @transform_3(%arg0: i32) -> (i32, i32) {
    %c0_i32 = arith.constant 0 : i32
    %c0_i32_0 = arith.constant 0 : i32
    %c0_i32_1 = arith.constant 0 : i32
    return %c0_i32, %c0_i32_0 : i32, i32
  }
  func.func @transform_4(%arg0: i32) -> (i32, i32) {
    %c0_i32 = arith.constant 0 : i32
    %c0_i32_0 = arith.constant 0 : i32
    %c0_i32_1 = arith.constant 0 : i32
    return %c0_i32, %c0_i32_0 : i32, i32
  }
  func.func @transform_5(%arg0: i32) -> (i32, i32) {
    %c0_i32 = arith.constant 0 : i32
    %c0_i32_0 = arith.constant 0 : i32
    %c0_i32_1 = arith.constant 0 : i32
    return %c0_i32, %c0_i32_0 : i32, i32
  }
  func.func @transform_6(%arg0: i32) -> (i32, i32) {
    %c0_i32 = arith.constant 0 : i32
    %c0_i32_0 = arith.constant 0 : i32
    return %arg0, %c0_i32 : i32, i32
  }
}

</mosaic_0001>

<llo_original>
// kernel: tpu_custom_call.1
$region0: #{tpu_custom_call.1}
  #allocation0 [shape = 'u32[]', space=smem, size = 0x4, offset = 0x4, fixed_abs, tag = 'smem constant byte address 0x4 - core index']
  #allocation1 [shape = 'u32[144,128]{1,0:T(1,128)}', space=vmem, size = 0x12000, scoped, tag = 'internal scratch']
  %s0 = inlined_call_operand.vmem [shape: s32[24,3], index: 0, kind: input, shape index: {}]
  %s1 = inlined_call_operand.vmem [shape: bf16[16,128], index: 1, kind: input, shape index: {}]
  %s2 = inlined_call_operand.hbm [shape: bf16[128,128], index: 2, kind: input, shape index: {}]
  %s3 = inlined_call_operand.vmem [shape: f32[1,128], index: 3, kind: input, shape index: {}]
  %s4 = inlined_call_operand.hbm [shape: bf16[128,128], index: 4, kind: input, shape index: {}]
  %s5 = inlined_call_operand.vmem [shape: f32[1,128], index: 5, kind: input, shape index: {}]
  %s6 = inlined_call_operand.hbm [shape: f32[24,128], index: 6, kind: output, shape index: {}]
  %s7 = sld [smem:[#allocation0]]
  $region65: #{tpu_custom_call.1} parent=0
    _
  %s9 = ssub.s32 1, %s7
  %s10 = scalar_select 0, %s9, %s7
  $region1: #{tpu_custom_call.1} parent=0
    #allocation2 [shape = 'u8[32768]{0}', space=vmem, size = 0x8000, scoped, tag = 'input window, operand 2, single buffered']
    #allocation3 [shape = 's32[2]{0}', space=sflag, size = 0x8, scoped, tag = 'scoped memory for tpu_custom_call.1']
    #allocation4 [shape = 's32[2]{0}', space=sflag, size = 0x8, scoped, tag = 'scoped memory for tpu_custom_call.1']
    #allocation5 [shape = 'u8[32768]{0}', space=vmem, size = 0x8000, scoped, tag = 'input window, operand 4, single buffered']
    #allocation6 [shape = 's32[1]{0}', space=sflag, size = 0x4, scoped, tag = 'scoped memory for tpu_custom_call.1']
    #allocation7 [shape = 'u8[8192]{0}', space=vmem, size = 0x2000, scoped, tag = 'output window, operand 0']
    %11 = vsyncpa [#allocation3], 0
    %12 = vsyncpa [#allocation6], 0
    %13 = vsyncpa [#allocation4], 0
    %s14 = scalar_lea.sflag [#allocation4], 1
    %15 = vsyncpa %s14, 0
    loop: start=0, step=1, limit=5
    $region2: #{tpu_custom_call.1} parent=1 // loop_pre_header
      _
    $region3: #{tpu_custom_call.1} parent=1 // loop_header
      %s17 = sphi 0, %s21
      %p18 = scmp.ge.s32.totalorder %s17, 5
      %s27 = sphi 0, %s29
      %s30 = sphi 0, %s27
      %s31 = sphi 0, %s30
      %s47 = sphi 0, %s31
      %s51 = sphi 0, %s51
      %s53 = sphi 0, %s51
      %s54 = sphi 0, %s53
      %s68 = sphi 0, %s54
      %s72 = sphi 0, %s72
      %s74 = sphi 0, %s72
      %s75 = sphi 0, %s74
      %s89 = sphi 0, %s75
      %s93 = sphi 0, %s93
      %s95 = sphi 0, %s93
      %s96 = sphi 0, %s95
      %s110 = sphi 0, %s96
      %s114 = sphi 0, %s114
      %s116 = sphi 0, %s114
      %s117 = sphi 0, %s116
      %s131 = sphi 0, %s117
      %s135 = sphi 0, %s135
      %s137 = sphi 0, %s135
      %s138 = sphi 0, %s137
      %s152 = sphi 0, %s138
      %s158 = sphi 0, %s160
      %s161 = sphi 0, %s158
      %s162 = sphi 0, %s161
      %s178 = sphi 0, %s162
    $region4: #{tpu_custom_call.1} parent=1 // loop_header_branch
      %20 = sbr.rel (%p18) target = $region8
    $region5: #{tpu_custom_call.1} parent=1 // loop_body
      %s22 = ssub.s32 %s17, 1
      %s23 = ssub.s32 %s17, 2
      %s24 = sadd.s32 %s17, 1
      %s25 = ssub.s32 %s17, %s24
      %p26 = scmp.eq.s32.totalorder %s25, 0
      %s28 = sadd.s32 %s27, 1
      %s29 = scalar_select %p26, %s27, %s28
      %p32 = pneg %p26
      %p33 = scmp.eq.s32.totalorder %s17, 2
      %p34 = por %p32, %p33
      %p35 = scmp.ne.s32.totalorder %s27, %s30
      %p36 = scmp.eq.s32.totalorder %s17, 0
      %p37 = por %p35, %p36
      %p38 = scmp.ne.s32.totalorder %s27, %s30
      %p39 = scmp.eq.s32.totalorder %s22, 2
      %p40 = por %p38, %p39
      %p41 = scmp.ne.s32.totalorder %s30, %s31
      %p42 = scmp.eq.s32.totalorder %s22, 0
      %p43 = por %p41, %p42
      %p44 = scmp.ne.s32.totalorder %s30, %s31
      %p45 = scmp.eq.s32.totalorder %s23, 2
      %p46 = por %p44, %p45
      %p48 = scmp.ne.s32.totalorder %s31, %s47
      %p49 = scmp.eq.s32.totalorder %s23, 0
      %p50 = por %p48, %p49
      %s52 = sadd.s32 %s51, 1
      %p55 = scmp.eq.s32.totalorder %s17, 2
      %p56 = scmp.ne.s32.totalorder %s51, %s53
      %p57 = scmp.eq.s32.totalorder %s17, 0
      %p58 = por %p56, %p57
      %p59 = scmp.ne.s32.totalorder %s51, %s53
      %p60 = scmp.eq.s32.totalorder %s22, 2
      %p61 = por %p59, %p60
      %p62 = scmp.ne.s32.totalorder %s53, %s54
      %p63 = scmp.eq.s32.totalorder %s22, 0
      %p64 = por %p62, %p63
      %p65 = scmp.ne.s32.totalorder %s53, %s54
      %p66 = scmp.eq.s32.totalorder %s23, 2
      %p67 = por %p65, %p66
      %p69 = scmp.ne.s32.totalorder %s54, %s68
      %p70 = scmp.eq.s32.totalorder %s23, 0
      %p71 = por %p69, %p70
      %s73 = sadd.s32 %s72, 1
      %p76 = scmp.eq.s32.totalorder %s17, 2
      %p77 = scmp.ne.s32.totalorder %s72, %s74
      %p78 = scmp.eq.s32.totalorder %s17, 0
      %p79 = por %p77, %p78
      %p80 = scmp.ne.s32.totalorder %s72, %s74
      %p81 = scmp.eq.s32.totalorder %s22, 2
      %p82 = por %p80, %p81
      %p83 = scmp.ne.s32.totalorder %s74, %s75
      %p84 = scmp.eq.s32.totalorder %s22, 0
      %p85 = por %p83, %p84
      %p86 = scmp.ne.s32.totalorder %s74, %s75
      %p87 = scmp.eq.s32.totalorder %s23, 2
      %p88 = por %p86, %p87
      %p90 = scmp.ne.s32.totalorder %s75, %s89
      %p91 = scmp.eq.s32.totalorder %s23, 0
      %p92 = por %p90, %p91
      %s94 = sadd.s32 %s93, 1
      %p97 = scmp.eq.s32.totalorder %s17, 2
      %p98 = scmp.ne.s32.totalorder %s93, %s95
      %p99 = scmp.eq.s32.totalorder %s17, 0
      %p100 = por %p98, %p99
      %p101 = scmp.ne.s32.totalorder %s93, %s95
      %p102 = scmp.eq.s32.totalorder %s22, 2
      %p103 = por %p101, %p102
      %p104 = scmp.ne.s32.totalorder %s95, %s96
      %p105 = scmp.eq.s32.totalorder %s22, 0
      %p106 = por %p104, %p105
      %p107 = scmp.ne.s32.totalorder %s95, %s96
      %p108 = scmp.eq.s32.totalorder %s23, 2
      %p109 = por %p107, %p108
      %p111 = scmp.ne.s32.totalorder %s96, %s110
      %p112 = scmp.eq.s32.totalorder %s23, 0
      %p113 = por %p111, %p112
      %s115 = sadd.s32 %s114, 1
      %p118 = scmp.eq.s32.totalorder %s17, 2
      %p119 = scmp.ne.s32.totalorder %s114, %s116
      %p120 = scmp.eq.s32.totalorder %s17, 0
      %p121 = por %p119, %p120
      %p122 = scmp.ne.s32.totalorder %s114, %s116
      %p123 = scmp.eq.s32.totalorder %s22, 2
      %p124 = por %p122, %p123
      %p125 = scmp.ne.s32.totalorder %s116, %s117
      %p126 = scmp.eq.s32.totalorder %s22, 0
      %p127 = por %p125, %p126
      %p128 = scmp.ne.s32.totalorder %s116, %s117
      %p129 = scmp.eq.s32.totalorder %s23, 2
      %p130 = por %p128, %p129
      %p132 = scmp.ne.s32.totalorder %s117, %s131
      %p133 = scmp.eq.s32.totalorder %s23, 0
      %p134 = por %p132, %p133
      %s136 = sadd.s32 %s135, 1
      %p139 = scmp.eq.s32.totalorder %s17, 2
      %p140 = scmp.ne.s32.totalorder %s135, %s137
      %p141 = scmp.eq.s32.totalorder %s17, 0
      %p142 = por %p140, %p141
      %p143 = scmp.ne.s32.totalorder %s135, %s137
      %p144 = scmp.eq.s32.totalorder %s22, 2
      %p145 = por %p143, %p144
      %p146 = scmp.ne.s32.totalorder %s137, %s138
      %p147 = scmp.eq.s32.totalorder %s22, 0
      %p148 = por %p146, %p147
      %p149 = scmp.ne.s32.totalorder %s137, %s138
      %p150 = scmp.eq.s32.totalorder %s23, 2
      %p151 = por %p149, %p150
      %p153 = scmp.ne.s32.totalorder %s138, %s152
      %p154 = scmp.eq.s32.totalorder %s23, 0
      %p155 = por %p153, %p154
      %s156 = ssub.s32 %s17, %s24
      %p157 = scmp.eq.s32.totalorder %s156, 0
      %s159 = sadd.s32 %s158, 1
      %s160 = scalar_select %p157, %s158, %s159
      %p163 = pneg %p157
      %p164 = scmp.eq.s32.totalorder %s17, 2
      %p165 = por %p163, %p164
      %p166 = scmp.ne.s32.totalorder %s158, %s161
      %p167 = scmp.eq.s32.totalorder %s17, 0
      %p168 = por %p166, %p167
      %p169 = scmp.ne.s32.totalorder %s158, %s161
      %p170 = scmp.eq.s32.totalorder %s22, 2
      %p171 = por %p169, %p170
      %p172 = scmp.ne.s32.totalorder %s161, %s162
      %p173 = scmp.eq.s32.totalorder %s22, 0
      %p174 = por %p172, %p173
      %p175 = scmp.ne.s32.totalorder %s161, %s162
      %p176 = scmp.eq.s32.totalorder %s23, 2
      %p177 = por %p175, %p176
      %p179 = scmp.ne.s32.totalorder %s162, %s178
      %p180 = scmp.eq.s32.totalorder %s23, 0
      %p181 = por %p179, %p180
      %p182 = scmp.le.s32.totalorder 1, %s17
      %p183 = scmp.lt.s32.totalorder %s17, 4
      %p184 = pnand %p182, %p183
      %p185 = pneg %p184
      // Predicated region
      $region9: #{tpu_custom_call.1} parent=5 // pred_check
        _
      $region10: #{tpu_custom_call.1} parent=5 // pred_check_branch
        %187 = sbr.rel (%p184) target = $region12
      $region11: #{tpu_custom_call.1} parent=5 // pred_region
        %s188 = ssub.s32 %s17, 1
        // Predicated region
        $region13: #{tpu_custom_call.1} parent=11 // pred_check
          %p189 = pneg %p64
        $region14: #{tpu_custom_call.1} parent=11 // pred_check_branch
          %191 = sbr.rel (%p189) target = $region16
        $region15: #{tpu_custom_call.1} parent=11 // pred_region
          _
        $region16: #{tpu_custom_call.1} parent=11 // pred_fallthru
          _
        // Predicated region
        $region17: #{tpu_custom_call.1} parent=11 // pred_check
          %p192 = pneg %p85
        $region18: #{tpu_custom_call.1} parent=11 // pred_check_branch
          %194 = sbr.rel (%p192) target = $region20
        $region19: #{tpu_custom_call.1} parent=11 // pred_region
          %s196 = ssub.s32 1024, 1024
          %197 = vsyncadd [#allocation3], %s196
          %s198 = sshll.u32 [#allocation2], 4
          %s199 = int_to_ptr.vmem [resolvable:$true] %s198
          %204 = dma.hbm_to_vmem [thread:$0]  %s2, 1024, %s199, [#allocation3], 64, 64, 4
        $region20: #{tpu_custom_call.1} parent=11 // pred_fallthru
          _
        // Predicated region
        $region21: #{tpu_custom_call.1} parent=11 // pred_check
          %p205 = pneg %p106
        $region22: #{tpu_custom_call.1} parent=11 // pred_check_branch
          %207 = sbr.rel (%p205) target = $region24
        $region23: #{tpu_custom_call.1} parent=11 // pred_region
          _
        $region24: #{tpu_custom_call.1} parent=11 // pred_fallthru
          _
        // Predicated region
        $region25: #{tpu_custom_call.1} parent=11 // pred_check
          %p208 = pneg %p127
        $region26: #{tpu_custom_call.1} parent=11 // pred_check_branch
          %210 = sbr.rel (%p208) target = $region28
        $region27: #{tpu_custom_call.1} parent=11 // pred_region
          %s212 = ssub.s32 1024, 1024
          %213 = vsyncadd [#allocation6], %s212
          %s214 = sshll.u32 [#allocation5], 4
          %s215 = int_to_ptr.vmem [resolvable:$true] %s214
          %220 = dma.hbm_to_vmem [thread:$0]  %s4, 1024, %s215, [#allocation6], 64, 64, 4
        $region28: #{tpu_custom_call.1} parent=11 // pred_fallthru
          _
        // Predicated region
        $region29: #{tpu_custom_call.1} parent=11 // pred_check
          %p221 = pneg %p148
        $region30: #{tpu_custom_call.1} parent=11 // pred_check_branch
          %223 = sbr.rel (%p221) target = $region32
        $region31: #{tpu_custom_call.1} parent=11 // pred_region
          _
        $region32: #{tpu_custom_call.1} parent=11 // pred_fallthru
          _
      $region12: #{tpu_custom_call.1} parent=5 // pred_fallthru
        _
      %p224 = scmp.lt.s32.totalorder %s17, 3
      // Predicated region
      $region33: #{tpu_custom_call.1} parent=5 // pred_check
        %p225 = pneg %p224
      $region34: #{tpu_custom_call.1} parent=5 // pred_check_branch
        %227 = sbr.rel (%p225) target = $region36
      $region35: #{tpu_custom_call.1} parent=5 // pred_region
        // Predicated region
        $region37: #{tpu_custom_call.1} parent=35 // pred_check
          %p228 = pneg %p37
        $region38: #{tpu_custom_call.1} parent=35 // pred_check_branch
          %230 = sbr.rel (%p228) target = $region40
        $region39: #{tpu_custom_call.1} parent=35 // pred_region
          %p231 = scmp.lt.s32.totalorder %s17, 2
          %s232 = scalar_select %p231, %s17, 2
          %s233 = smul.addr %s232, 8
          %s234 = scalar_lea.vmem %s0, %s233
        $region40: #{tpu_custom_call.1} parent=35 // pred_fallthru
          _
      $region36: #{tpu_custom_call.1} parent=5 // pred_fallthru
        _
      %p235 = scmp.le.s32.totalorder 1, %s17
      %p236 = scmp.lt.s32.totalorder %s17, 4
      %p237 = pnand %p235, %p236
      %p238 = pneg %p237
      // Predicated region
      $region41: #{tpu_custom_call.1} parent=5 // pred_check
        _
      $region42: #{tpu_custom_call.1} parent=5 // pred_check_branch
        %240 = sbr.rel (%p237) target = $region44
      $region43: #{tpu_custom_call.1} parent=5 // pred_region
        %s241 = ssub.s32 %s17, 1
        // Predicated region
        $region45: #{tpu_custom_call.1} parent=43 // pred_check
          %p242 = pneg %p85
        $region46: #{tpu_custom_call.1} parent=43 // pred_check_branch
          %244 = sbr.rel (%p242) target = $region48
        $region47: #{tpu_custom_call.1} parent=43 // pred_region
          %245 = dma.done [#allocation3], 1024
        $region48: #{tpu_custom_call.1} parent=43 // pred_fallthru
          _
        // Predicated region
        $region49: #{tpu_custom_call.1} parent=43 // pred_check
          %p246 = pneg %p127
        $region50: #{tpu_custom_call.1} parent=43 // pred_check_branch
          %248 = sbr.rel (%p246) target = $region52
        $region51: #{tpu_custom_call.1} parent=43 // pred_region
          %249 = dma.done [#allocation6], 1024
        $region52: #{tpu_custom_call.1} parent=43 // pred_fallthru
          _
        %p250 = scmp.lt.s32.totalorder %s22, 2
        %s251 = scalar_select %p250, %s22, 2
        %s252 = smul.addr %s251, 8
        %s253 = scalar_lea.vmem %s0, %s252
        %p254 = pneg %p43
        %p255 = pneg %p40
        %p256 = pneg %p64
        %p257 = pneg %p61
        %p258 = pneg %p85
        %p259 = pneg %p82
        %p260 = pneg %p106
        %p261 = pneg %p103
        %p262 = pneg %p127
        %p263 = pneg %p124
        %p264 = pneg %p148
        %p265 = pneg %p145
        %p266 = pneg %p174
        %p267 = pneg %p171
        %s268 = sand.u32 %s161, 1
        %s269 = scalar_lea.sflag [#allocation4], %s268
        %s270 = sand.u32 %s161, 1
        %s271 = smul.addr %s270, 8
        %s272 = scalar_lea.vmem [#allocation7], %s271
        %p273 = scmp.lt.s32.totalorder %s22, 2
        %s274 = scalar_select %p273, %s22, 2
        %s275 = smul.addr %s274, 8
        %s276 = scalar_lea.vmem %s0, %s275
        %v278 = vld [vmem:[%s276] sm:$0xff]
        %v279 = vlaneseq
        %v280 = vand.u32 %v279, 127
        %281 = vset.pattern.permute.xlu0 0
        %282 = vperm.xlu0 %281, %v278
        %v283 = vpop.permute.xlu0 %282
        %vm284 = vcmp.eq.s32.totalorder %v280, %v283
        %v285 = vsel %vm284, 1, 0
        %v286 = vcvt.s32.f32 %v285
        %v287 = vadd.f32 %v286, 0.0
        %288 = vset.pattern.permute.xlu0 1
        %289 = vperm.xlu0 %288, %v278
        %v290 = vpop.permute.xlu0 %289
        %vm291 = vcmp.eq.s32.totalorder %v280, %v290
        %v292 = vsel %vm291, 1, 0
        %v293 = vcvt.s32.f32 %v292
        %v294 = vadd.f32 %v287, %v293
        %295 = vset.pattern.permute.xlu0 2
        %296 = vperm.xlu0 %295, %v278
        %v297 = vpop.permute.xlu0 %296
        %vm298 = vcmp.eq.s32.totalorder %v280, %v297
        %v299 = vsel %vm298, 1, 0
        %v300 = vcvt.s32.f32 %v299
        %v301 = vadd.f32 %v294, %v300
        %v302 = vpack.c.bf16 %v301, %v301
        %v303 = vld [vmem:[%s1] sm:$0xf]
        %v304 = vld [vmem:[%s1 + $0x4] sm:$0xf]
        %v307 = vunpack.c.l.b16 %v303
        %v308 = vunpack.c.l.b16 %v304
        %v309 = vpack.c.b16 %v308, %v307
        %vm311 = vcmask 130048
        %v313 = vsel %vm311, %v302, 0
        %315 = vmatprep.subr.bf16.mxu0 0
        %316 = vmatpush1.bf16.msra.mxu0 0
        %317 = vmatprep.subr.bf16.mxu0 0
        %318 = vmatpush1.bf16.msra.mxu0 0
        %319 = vmatprep.subr.bf16.mxu0 0
        %320 = vmatpush1.bf16.msra.mxu0 0
        %321 = vmatprep.subr.bf16.mxu0 0
        %322 = vmatpush1.bf16.msra.mxu0 0
        %323 = vmatprep.subr.bf16.mxu0 0
        %324 = vmatpush1.bf16.msra.mxu0 0
        %325 = vmatprep.subr.bf16.mxu0 0
        %326 = vmatpush1.bf16.msra.mxu0 0
        %327 = vmatprep.subr.bf16.mxu0 0
        %328 = vmatpush1.bf16.msra.mxu0 0
        %329 = vmatprep.subr.bf16.mxu0 0
        %330 = vmatpush1.bf16.msra.mxu0 %v309
        %331 = vmatprep.subr.bf16.mxu0 0
        %332 = vmatpush2.bf16.msra.mxu0 0
        %333 = vmatprep.subr.bf16.mxu0 0
        %334 = vmatpush2.bf16.msra.mxu0 0
        %335 = vmatprep.subr.bf16.mxu0 0
        %336 = vmatpush2.bf16.msra.mxu0 0
        %337 = vmatprep.subr.bf16.mxu0 0
        %338 = vmatpush2.bf16.msra.mxu0 0
        %339 = vmatprep.subr.bf16.mxu0 0
        %340 = vmatpush2.bf16.msra.mxu0 0
        %341 = vmatprep.subr.bf16.mxu0 0
        %342 = vmatpush2.bf16.msra.mxu0 0
        %343 = vmatprep.subr.bf16.mxu0 0
        %344 = vmatpush2.bf16.msra.mxu0 0
        %345 = vmatprep.subr.bf16.mxu0 0
        %346 = vmatpush2.bf16.msra.mxu0 0
        %347 = vmatprep.mubr.bf16.mxu0 0
        %348 = vmatmul.mubr.bf16.gmra.mxu0 %v313
        %v349 = vpop.f32.mrf.mxu0
        %v350 = vadd.f32 0.0, %v349
        %v351 = vpop.f32.mrf.mxu0
        %v352 = vpop.f32.mrf.mxu0
        %v353 = vpop.f32.mrf.mxu0
        %354 = vdwg.mxu0
        %v355 = vpack.c.bf16 %v350, %v350
        %v356 = vld [vmem:[#allocation2] sm:$0xf]
        %v357 = vld [vmem:[#allocation2 + $0x4] sm:$0xf]
        %v358 = vld [vmem:[#allocation2 + $0x8] sm:$0xf]
        %v359 = vld [vmem:[#allocation2 + $0xc] sm:$0xf]
        %v360 = vld [vmem:[#allocation2 + $0x10] sm:$0xf]
        %v361 = vld [vmem:[#allocation2 + $0x14] sm:$0xf]
        %v362 = vld [vmem:[#allocation2 + $0x18] sm:$0xf]
        %v363 = vld [vmem:[#allocation2 + $0x1c] sm:$0xf]
        %v364 = vld [vmem:[#allocation2 + $0x20] sm:$0xf]
        %v365 = vld [vmem:[#allocation2 + $0x24] sm:$0xf]
        %v366 = vld [vmem:[#allocation2 + $0x28] sm:$0xf]
        %v367 = vld [vmem:[#allocation2 + $0x2c] sm:$0xf]
        %v368 = vld [vmem:[#allocation2 + $0x30] sm:$0xf]
        %v369 = vld [vmem:[#allocation2 + $0x34] sm:$0xf]
        %v370 = vld [vmem:[#allocation2 + $0x38] sm:$0xf]
        %v371 = vld [vmem:[#allocation2 + $0x3c] sm:$0xf]
        %v372 = vld [vmem:[%s3] sm:$0x1]
        %v374 = vlaneseq
        %v375 = vshrl.u32 %v374, 7
        %v376 = vsub.s32 0, %v375
        %v377 = vrot.slane %v372, %v376
        %v395 = vunpack.c.l.b16 %v356
        %v396 = vunpack.c.l.b16 %v357
        %v397 = vunpack.c.l.b16 %v358
        %v398 = vunpack.c.l.b16 %v359
        %v399 = vunpack.c.l.b16 %v360
        %v400 = vunpack.c.l.b16 %v361
        %v401 = vunpack.c.l.b16 %v362
        %v402 = vunpack.c.l.b16 %v363
        %v403 = vunpack.c.l.b16 %v364
        %v404 = vunpack.c.l.b16 %v365
        %v405 = vunpack.c.l.b16 %v366
        %v406 = vunpack.c.l.b16 %v367
        %v407 = vunpack.c.l.b16 %v368
        %v408 = vunpack.c.l.b16 %v369
        %v409 = vunpack.c.l.b16 %v370
        %v410 = vunpack.c.l.b16 %v371
        %v411 = vpack.c.b16 %v396, %v395
        %v412 = vpack.c.b16 %v398, %v397
        %v413 = vpack.c.b16 %v400, %v399
        %v414 = vpack.c.b16 %v402, %v401
        %v415 = vpack.c.b16 %v404, %v403
        %v416 = vpack.c.b16 %v406, %v405
        %v417 = vpack.c.b16 %v408, %v407
        %v418 = vpack.c.b16 %v410, %v409
        %427 = vmatprep.subr.bf16.mxu0 0
        %428 = vmatpush1.bf16.msra.mxu0 %v418
        %429 = vmatprep.subr.bf16.mxu0 0
        %430 = vmatpush1.bf16.msra.mxu0 %v417
        %431 = vmatprep.subr.bf16.mxu0 0
        %432 = vmatpush1.bf16.msra.mxu0 %v416
        %433 = vmatprep.subr.bf16.mxu0 0
        %434 = vmatpush1.bf16.msra.mxu0 %v415
        %435 = vmatprep.subr.bf16.mxu0 0
        %436 = vmatpush1.bf16.msra.mxu0 %v414
        %437 = vmatprep.subr.bf16.mxu0 0
        %438 = vmatpush1.bf16.msra.mxu0 %v413
        %439 = vmatprep.subr.bf16.mxu0 0
        %440 = vmatpush1.bf16.msra.mxu0 %v412
        %441 = vmatprep.subr.bf16.mxu0 0
        %442 = vmatpush1.bf16.msra.mxu0 %v411
        %443 = vmatprep.subr.bf16.mxu0 0
        %444 = vmatpush2.bf16.msra.mxu0 0
        %445 = vmatprep.subr.bf16.mxu0 0
        %446 = vmatpush2.bf16.msra.mxu0 0
        %447 = vmatprep.subr.bf16.mxu0 0
        %448 = vmatpush2.bf16.msra.mxu0 0
        %449 = vmatprep.subr.bf16.mxu0 0
        %450 = vmatpush2.bf16.msra.mxu0 0
        %451 = vmatprep.subr.bf16.mxu0 0
        %452 = vmatpush2.bf16.msra.mxu0 0
        %453 = vmatprep.subr.bf16.mxu0 0
        %454 = vmatpush2.bf16.msra.mxu0 0
        %455 = vmatprep.subr.bf16.mxu0 0
        %456 = vmatpush2.bf16.msra.mxu0 0
        %457 = vmatprep.subr.bf16.mxu0 0
        %458 = vmatpush2.bf16.msra.mxu0 0
        %459 = vmatprep.mubr.bf16.mxu0 0
        %460 = vmatmul.mubr.bf16.gmra.mxu0 %v355
        %v461 = vpop.f32.mrf.mxu0
        %v462 = vadd.f32 %v377, %v461
        %v463 = vpop.f32.mrf.mxu0
        %v464 = vpop.f32.mrf.mxu0
        %v465 = vpop.f32.mrf.mxu0
        %466 = vdwg.mxu0
        %v467 = vmax.f32 %v462, 0.0
        %v468 = vpack.c.bf16 %v467, %v467
        %v469 = vld [vmem:[#allocation5] sm:$0xf]
        %v470 = vld [vmem:[#allocation5 + $0x4] sm:$0xf]
        %v471 = vld [vmem:[#allocation5 + $0x8] sm:$0xf]
        %v472 = vld [vmem:[#allocation5 + $0xc] sm:$0xf]
        %v473 = vld [vmem:[#allocation5 + $0x10] sm:$0xf]
        %v474 = vld [vmem:[#allocation5 + $0x14] sm:$0xf]
        %v475 = vld [vmem:[#allocation5 + $0x18] sm:$0xf]
        %v476 = vld [vmem:[#allocation5 + $0x1c] sm:$0xf]
        %v477 = vld [vmem:[#allocation5 + $0x20] sm:$0xf]
        %v478 = vld [vmem:[#allocation5 + $0x24] sm:$0xf]
        %v479 = vld [vmem:[#allocation5 + $0x28] sm:$0xf]
        %v480 = vld [vmem:[#allocation5 + $0x2c] sm:$0xf]
        %v481 = vld [vmem:[#allocation5 + $0x30] sm:$0xf]
        %v482 = vld [vmem:[#allocation5 + $0x34] sm:$0xf]
        %v483 = vld [vmem:[#allocation5 + $0x38] sm:$0xf]
        %v484 = vld [vmem:[#allocation5 + $0x3c] sm:$0xf]
        %v485 = vld [vmem:[%s5] sm:$0x1]
        %v487 = vlaneseq
        %v488 = vshrl.u32 %v487, 7
        %v489 = vsub.s32 0, %v488
        %v490 = vrot.slane %v485, %v489
        %v508 = vunpack.c.l.b16 %v469
        %v509 = vunpack.c.l.b16 %v470
        %v510 = vunpack.c.l.b16 %v471
        %v511 = vunpack.c.l.b16 %v472
        %v512 = vunpack.c.l.b16 %v473
        %v513 = vunpack.c.l.b16 %v474
        %v514 = vunpack.c.l.b16 %v475
        %v515 = vunpack.c.l.b16 %v476
        %v516 = vunpack.c.l.b16 %v477
        %v517 = vunpack.c.l.b16 %v478
        %v518 = vunpack.c.l.b16 %v479
        %v519 = vunpack.c.l.b16 %v480
        %v520 = vunpack.c.l.b16 %v481
        %v521 = vunpack.c.l.b16 %v482
        %v522 = vunpack.c.l.b16 %v483
        %v523 = vunpack.c.l.b16 %v484
        %v524 = vpack.c.b16 %v509, %v508
        %v525 = vpack.c.b16 %v511, %v510
        %v526 = vpack.c.b16 %v513, %v512
        %v527 = vpack.c.b16 %v515, %v514
        %v528 = vpack.c.b16 %v517, %v516
        %v529 = vpack.c.b16 %v519, %v518
        %v530 = vpack.c.b16 %v521, %v520
        %v531 = vpack.c.b16 %v523, %v522
        %540 = vmatprep.subr.bf16.mxu0 0
        %541 = vmatpush1.bf16.msra.mxu0 %v531
        %542 = vmatprep.subr.bf16.mxu0 0
        %543 = vmatpush1.bf16.msra.mxu0 %v530
        %544 = vmatprep.subr.bf16.mxu0 0
        %545 = vmatpush1.bf16.msra.mxu0 %v529
        %546 = vmatprep.subr.bf16.mxu0 0
        %547 = vmatpush1.bf16.msra.mxu0 %v528
        %548 = vmatprep.subr.bf16.mxu0 0
        %549 = vmatpush1.bf16.msra.mxu0 %v527
        %550 = vmatprep.subr.bf16.mxu0 0
        %551 = vmatpush1.bf16.msra.mxu0 %v526
        %552 = vmatprep.subr.bf16.mxu0 0
        %553 = vmatpush1.bf16.msra.mxu0 %v525
        %554 = vmatprep.subr.bf16.mxu0 0
        %555 = vmatpush1.bf16.msra.mxu0 %v524
        %556 = vmatprep.subr.bf16.mxu0 0
        %557 = vmatpush2.bf16.msra.mxu0 0
        %558 = vmatprep.subr.bf16.mxu0 0
        %559 = vmatpush2.bf16.msra.mxu0 0
        %560 = vmatprep.subr.bf16.mxu0 0
        %561 = vmatpush2.bf16.msra.mxu0 0
        %562 = vmatprep.subr.bf16.mxu0 0
        %563 = vmatpush2.bf16.msra.mxu0 0
        %564 = vmatprep.subr.bf16.mxu0 0
        %565 = vmatpush2.bf16.msra.mxu0 0
        %566 = vmatprep.subr.bf16.mxu0 0
        %567 = vmatpush2.bf16.msra.mxu0 0
        %568 = vmatprep.subr.bf16.mxu0 0
        %569 = vmatpush2.bf16.msra.mxu0 0
        %570 = vmatprep.subr.bf16.mxu0 0
        %571 = vmatpush2.bf16.msra.mxu0 0
        %572 = vmatprep.mubr.bf16.mxu0 0
        %573 = vmatmul.mubr.bf16.gmra.mxu0 %v468
        %v574 = vpop.f32.mrf.mxu0
        %v575 = vadd.f32 %v490, %v574
        %v576 = vpop.f32.mrf.mxu0
        %v577 = vpop.f32.mrf.mxu0
        %v578 = vpop.f32.mrf.mxu0
        %579 = vdwg.mxu0
        %580 = vst [vmem:[%s272] sm:$0xff] %v575
        %s581 = sand.u32 %s161, 1
        %s582 = scalar_lea.sflag [#allocation4], %s581
        %s583 = sand.u32 %s161, 1
        %s584 = smul.addr %s583, 8
        %s585 = scalar_lea.vmem [#allocation7], %s584
        // Predicated region
        $region53: #{tpu_custom_call.1} parent=43 // pred_check
          %p586 = pneg %p171
        $region54: #{tpu_custom_call.1} parent=43 // pred_check_branch
          %588 = sbr.rel (%p586) target = $region56
        $region55: #{tpu_custom_call.1} parent=43 // pred_region
          %s590 = ssub.s32 128, 128
          %591 = vsyncadd %s582, %s590
          %s592 = smul.addr %s22, 128
          %s593 = scalar_lea.hbm %s6, %s592
          %s595 = sshll.u32 %s585, 4
          %s596 = int_to_ptr.vmem [resolvable:$true] %s595
          %598 = dma.vmem_to_hbm [thread:$0]  %s596, 128, %s593, %s582
        $region56: #{tpu_custom_call.1} parent=43 // pred_fallthru
          _
      $region44: #{tpu_custom_call.1} parent=5 // pred_fallthru
        _
      %p599 = scmp.le.s32.totalorder 2, %s17
      // Predicated region
      $region57: #{tpu_custom_call.1} parent=5 // pred_check
        %p600 = pneg %p599
      $region58: #{tpu_custom_call.1} parent=5 // pred_check_branch
        %602 = sbr.rel (%p600) target = $region60
      $region59: #{tpu_custom_call.1} parent=5 // pred_region
        %s603 = ssub.s32 %s17, 2
        // Predicated region
        $region61: #{tpu_custom_call.1} parent=59 // pred_check
          %p604 = pneg %p177
        $region62: #{tpu_custom_call.1} parent=59 // pred_check_branch
          %606 = sbr.rel (%p604) target = $region64
        $region63: #{tpu_custom_call.1} parent=59 // pred_region
          %s607 = sand.u32 %s162, 1
          %s608 = scalar_lea.sflag [#allocation4], %s607
          %s609 = sand.u32 %s162, 1
          %s610 = smul.addr %s609, 8
          %s611 = scalar_lea.vmem [#allocation7], %s610
          %612 = dma.done %s608, 128
        $region64: #{tpu_custom_call.1} parent=59 // pred_fallthru
          _
      $region60: #{tpu_custom_call.1} parent=5 // pred_fallthru
        _
    $region6: #{tpu_custom_call.1} parent=1 // loop_footer
      %s21 = sadd.s32 1, %s17
    $region7: #{tpu_custom_call.1} parent=1 // loop_footer_branch
      %16 = sbr.rel target = $region3
    $region8: #{tpu_custom_call.1} parent=1 // loop_exit
      _
    %613 = vsyncpa [#allocation3], 1
    %s614 = scalar_lea.sflag [#allocation3], 1
    %615 = vsyncpa %s614, 1
    %616 = vsyncpa [#allocation6], 1
    %617 = vsyncpa [#allocation4], 1
    %s618 = scalar_lea.sflag [#allocation4], 1
    %619 = vsyncpa %s618, 1

// kernel: tpu_custom_call.1
$region0: #{tpu_custom_call.1}
  #allocation0 [shape = 'u32[]', space=smem, size = 0x4, offset = 0x4, fixed_abs, tag = 'smem constant byte address 0x4 - core index']
  #allocation1 [shape = 'u32[144,128]{1,0:T(1,128)}', space=vmem, size = 0x12000, scoped, tag = 'internal scratch']
  %s0 = inlined_call_operand.vmem [shape: s32[24,3], index: 0, kind: input, shape index: {}]
  %s1 = inlined_call_operand.vmem [shape: bf16[16,128], index: 1, kind: input, shape index: {}]
  %s2 = inlined_call_operand.hbm [shape: bf16[128,128], index: 2, kind: input, shape index: {}]
  %s3 = inlined_call_operand.vmem [shape: f32[1,128], index: 3, kind: input, shape index: {}]
  %s4 = inlined_call_operand.hbm [shape: bf16[128,128], index: 4, kind: input, shape index: {}]
  %s5 = inlined_call_operand.vmem [shape: f32[1,128], index: 5, kind: input, shape index: {}]
  %s6 = inlined_call_operand.hbm [shape: f32[24,128], index: 6, kind: output, shape index: {}]
  %s7 = sld [smem:[#allocation0]]
  $region65: #{tpu_custom_call.1} parent=0
    _
  %s9 = ssub.s32 1, %s7
  %s10 = scalar_select 0, %s9, %s7
  $region1: #{tpu_custom_call.1} parent=0
    #allocation2 [shape = 'u8[32768]{0}', space=vmem, size = 0x8000, scoped, tag = 'input window, operand 2, single buffered']
    #allocation3 [shape = 's32[2]{0}', space=sflag, size = 0x8, scoped, tag = 'scoped memory for tpu_custom_call.1']
    #allocation4 [shape = 's32[2]{0}', space=sflag, size = 0x8, scoped, tag = 'scoped memory for tpu_custom_call.1']
    #allocation5 [shape = 'u8[32768]{0}', space=vmem, size = 0x8000, scoped, tag = 'input window, operand 4, single buffered']
    #allocation6 [shape = 's32[1]{0}', space=sflag, size = 0x4, scoped, tag = 'scoped memory for tpu_custom_call.1']
    #allocation7 [shape = 'u8[8192]{0}', space=vmem, size = 0x2000, scoped, tag = 'output window, operand 0']
    %11 = vsyncpa [#allocation3], 0
    %12 = vsyncpa [#allocation6], 0
    %13 = vsyncpa [#allocation4], 0
    %s14 = scalar_lea.sflag [#allocation4], 1
    %15 = vsyncpa %s14, 0
    loop: start=0, step=1, limit=5
    $region2: #{tpu_custom_call.1} parent=1 // loop_pre_header
      _
    $region3: #{tpu_custom_call.1} parent=1 // loop_header
      %s17 = sphi 0, %s21
      %p18 = scmp.ge.s32.totalorder %s17, 5
      %s27 = sphi 0, %s29
      %s30 = sphi 0, %s27
      %s31 = sphi 0, %s30
      %s47 = sphi 0, %s31
      %s51 = sphi 0, %s51
      %s53 = sphi 0, %s51
      %s54 = sphi 0, %s53
      %s68 = sphi 0, %s54
      %s72 = sphi 0, %s72
      %s74 = sphi 0, %s72
      %s75 = sphi 0, %s74
      %s89 = sphi 0, %s75
      %s93 = sphi 0, %s93
      %s95 = sphi 0, %s93
      %s96 = sphi 0, %s95
      %s110 = sphi 0, %s96
      %s114 = sphi 0, %s114
      %s116 = sphi 0, %s114
      %s117 = sphi 0, %s116
      %s131 = sphi 0, %s117
      %s135 = sphi 0, %s135
      %s137 = sphi 0, %s135
      %s138 = sphi 0, %s137
      %s152 = sphi 0, %s138
      %s158 = sphi 0, %s160
      %s161 = sphi 0, %s158
      %s162 = sphi 0, %s161
      %s178 = sphi 0, %s162
    $region4: #{tpu_custom_call.1} parent=1 // loop_header_branch
      %20 = sbr.rel (%p18) target = $region8
    $region5: #{tpu_custom_call.1} parent=1 // loop_body
      %s22 = ssub.s32 %s17, 1
      %s23 = ssub.s32 %s17, 2
      %s24 = sadd.s32 %s17, 1
      %s25 = ssub.s32 %s17, %s24
      %p26 = scmp.eq.s32.totalorder %s25, 0
      %s28 = sadd.s32 %s27, 1
      %s29 = scalar_select %p26, %s27, %s28
      %p32 = pneg %p26
      %p33 = scmp.eq.s32.totalorder %s17, 2
      %p34 = por %p32, %p33
      %p35 = scmp.ne.s32.totalorder %s27, %s30
      %p36 = scmp.eq.s32.totalorder %s17, 0
      %p37 = por %p35, %p36
      %p38 = scmp.ne.s32.totalorder %s27, %s30
      %p39 = scmp.eq.s32.totalorder %s22, 2
      %p40 = por %p38, %p39
      %p41 = scmp.ne.s32.totalorder %s30, %s31
      %p42 = scmp.eq.s32.totalorder %s22, 0
      %p43 = por %p41, %p42
      %p44 = scmp.ne.s32.totalorder %s30, %s31
      %p45 = scmp.eq.s32.totalorder %s23, 2
      %p46 = por %p44, %p45
      %p48 = scmp.ne.s32.totalorder %s31, %s47
      %p49 = scmp.eq.s32.totalorder %s23, 0
      %p50 = por %p48, %p49
      %s52 = sadd.s32 %s51, 1
      %p55 = scmp.eq.s32.totalorder %s17, 2
      %p56 = scmp.ne.s32.totalorder %s51, %s53
      %p57 = scmp.eq.s32.totalorder %s17, 0
      %p58 = por %p56, %p57
      %p59 = scmp.ne.s32.totalorder %s51, %s53
      %p60 = scmp.eq.s32.totalorder %s22, 2
      %p61 = por %p59, %p60
      %p62 = scmp.ne.s32.totalorder %s53, %s54
      %p63 = scmp.eq.s32.totalorder %s22, 0
      %p64 = por %p62, %p63
      %p65 = scmp.ne.s32.totalorder %s53, %s54
      %p66 = scmp.eq.s32.totalorder %s23, 2
      %p67 = por %p65, %p66
      %p69 = scmp.ne.s32.totalorder %s54, %s68
      %p70 = scmp.eq.s32.totalorder %s23, 0
      %p71 = por %p69, %p70
      %s73 = sadd.s32 %s72, 1
      %p76 = scmp.eq.s32.totalorder %s17, 2
      %p77 = scmp.ne.s32.totalorder %s72, %s74
      %p78 = scmp.eq.s32.totalorder %s17, 0
      %p79 = por %p77, %p78
      %p80 = scmp.ne.s32.totalorder %s72, %s74
      %p81 = scmp.eq.s32.totalorder %s22, 2
      %p82 = por %p80, %p81
      %p83 = scmp.ne.s32.totalorder %s74, %s75
      %p84 = scmp.eq.s32.totalorder %s22, 0
      %p85 = por %p83, %p84
      %p86 = scmp.ne.s32.totalorder %s74, %s75
      %p87 = scmp.eq.s32.totalorder %s23, 2
      %p88 = por %p86, %p87
      %p90 = scmp.ne.s32.totalorder %s75, %s89
      %p91 = scmp.eq.s32.totalorder %s23, 0
      %p92 = por %p90, %p91
      %s94 = sadd.s32 %s93, 1
      %p97 = scmp.eq.s32.totalorder %s17, 2
      %p98 = scmp.ne.s32.totalorder %s93, %s95
      %p99 = scmp.eq.s32.totalorder %s17, 0
      %p100 = por %p98, %p99
      %p101 = scmp.ne.s32.totalorder %s93, %s95
      %p102 = scmp.eq.s32.totalorder %s22, 2
      %p103 = por %p101, %p102
      %p104 = scmp.ne.s32.totalorder %s95, %s96
      %p105 = scmp.eq.s32.totalorder %s22, 0
      %p106 = por %p104, %p105
      %p107 = scmp.ne.s32.totalorder %s95, %s96
      %p108 = scmp.eq.s32.totalorder %s23, 2
      %p109 = por %p107, %p108
      %p111 = scmp.ne.s32.totalorder %s96, %s110
      %p112 = scmp.eq.s32.totalorder %s23, 0
      %p113 = por %p111, %p112
      %s115 = sadd.s32 %s114, 1
      %p118 = scmp.eq.s32.totalorder %s17, 2
      %p119 = scmp.ne.s32.totalorder %s114, %s116
      %p120 = scmp.eq.s32.totalorder %s17, 0
      %p121 = por %p119, %p120
      %p122 = scmp.ne.s32.totalorder %s114, %s116
      %p123 = scmp.eq.s32.totalorder %s22, 2
      %p124 = por %p122, %p123
      %p125 = scmp.ne.s32.totalorder %s116, %s117
      %p126 = scmp.eq.s32.totalorder %s22, 0
      %p127 = por %p125, %p126
      %p128 = scmp.ne.s32.totalorder %s116, %s117
      %p129 = scmp.eq.s32.totalorder %s23, 2
      %p130 = por %p128, %p129
      %p132 = scmp.ne.s32.totalorder %s117, %s131
      %p133 = scmp.eq.s32.totalorder %s23, 0
      %p134 = por %p132, %p133
      %s136 = sadd.s32 %s135, 1
      %p139 = scmp.eq.s32.totalorder %s17, 2
      %p140 = scmp.ne.s32.totalorder %s135, %s137
      %p141 = scmp.eq.s32.totalorder %s17, 0
      %p142 = por %p140, %p141
      %p143 = scmp.ne.s32.totalorder %s135, %s137
      %p144 = scmp.eq.s32.totalorder %s22, 2
      %p145 = por %p143, %p144
      %p146 = scmp.ne.s32.totalorder %s137, %s138
      %p147 = scmp.eq.s32.totalorder %s22, 0
      %p148 = por %p146, %p147
      %p149 = scmp.ne.s32.totalorder %s137, %s138
      %p150 = scmp.eq.s32.totalorder %s23, 2
      %p151 = por %p149, %p150
      %p153 = scmp.ne.s32.totalorder %s138, %s152
      %p154 = scmp.eq.s32.totalorder %s23, 0
      %p155 = por %p153, %p154
      %s156 = ssub.s32 %s17, %s24
      %p157 = scmp.eq.s32.totalorder %s156, 0
      %s159 = sadd.s32 %s158, 1
      %s160 = scalar_select %p157, %s158, %s159
      %p163 = pneg %p157
      %p164 = scmp.eq.s32.totalorder %s17, 2
      %p165 = por %p163, %p164
      %p166 = scmp.ne.s32.totalorder %s158, %s161
      %p167 = scmp.eq.s32.totalorder %s17, 0
      %p168 = por %p166, %p167
      %p169 = scmp.ne.s32.totalorder %s158, %s161
      %p170 = scmp.eq.s32.totalorder %s22, 2
      %p171 = por %p169, %p170
      %p172 = scmp.ne.s32.totalorder %s161, %s162
      %p173 = scmp.eq.s32.totalorder %s22, 0
      %p174 = por %p172, %p173
      %p175 = scmp.ne.s32.totalorder %s161, %s162
      %p176 = scmp.eq.s32.totalorder %s23, 2
      %p177 = por %p175, %p176
      %p179 = scmp.ne.s32.totalorder %s162, %s178
      %p180 = scmp.eq.s32.totalorder %s23, 0
      %p181 = por %p179, %p180
      %p182 = scmp.le.s32.totalorder 1, %s17
      %p183 = scmp.lt.s32.totalorder %s17, 4
      %p184 = pnand %p182, %p183
      %p185 = pneg %p184
      // Predicated region
      $region9: #{tpu_custom_call.1} parent=5 // pred_check
        _
      $region10: #{tpu_custom_call.1} parent=5 // pred_check_branch
        %187 = sbr.rel (%p184) target = $region12
      $region11: #{tpu_custom_call.1} parent=5 // pred_region
        %s188 = ssub.s32 %s17, 1
        // Predicated region
        $region13: #{tpu_custom_call.1} parent=11 // pred_check
          %p189 = pneg %p64
        $region14: #{tpu_custom_call.1} parent=11 // pred_check_branch
          %191 = sbr.rel (%p189) target = $region16
        $region15: #{tpu_custom_call.1} parent=11 // pred_region
          _
        $region16: #{tpu_custom_call.1} parent=11 // pred_fallthru
          _
        // Predicated region
        $region17: #{tpu_custom_call.1} parent=11 // pred_check
          %p192 = pneg %p85
        $region18: #{tpu_custom_call.1} parent=11 // pred_check_branch
          %194 = sbr.rel (%p192) target = $region20
        $region19: #{tpu_custom_call.1} parent=11 // pred_region
          %s196 = ssub.s32 1024, 1024
          %197 = vsyncadd [#allocation3], %s196
          %s198 = sshll.u32 [#allocation2], 4
          %s199 = int_to_ptr.vmem [resolvable:$true] %s198
          %204 = dma.hbm_to_vmem [thread:$0]  %s2, 1024, %s199, [#allocation3], 64, 64, 4
        $region20: #{tpu_custom_call.1} parent=11 // pred_fallthru
          _
        // Predicated region
        $region21: #{tpu_custom_call.1} parent=11 // pred_check
          %p205 = pneg %p106
        $region22: #{tpu_custom_call.1} parent=11 // pred_check_branch
          %207 = sbr.rel (%p205) target = $region24
        $region23: #{tpu_custom_call.1} parent=11 // pred_region
          _
        $region24: #{tpu_custom_call.1} parent=11 // pred_fallthru
          _
        // Predicated region
        $region25: #{tpu_custom_call.1} parent=11 // pred_check
          %p208 = pneg %p127
        $region26: #{tpu_custom_call.1} parent=11 // pred_check_branch
          %210 = sbr.rel (%p208) target = $region28
        $region27: #{tpu_custom_call.1} parent=11 // pred_region
          %s212 = ssub.s32 1024, 1024
          %213 = vsyncadd [#allocation6], %s212
          %s214 = sshll.u32 [#allocation5], 4
          %s215 = int_to_ptr.vmem [resolvable:$true] %s214
          %220 = dma.hbm_to_vmem [thread:$0]  %s4, 1024, %s215, [#allocation6], 64, 64, 4
        $region28: #{tpu_custom_call.1} parent=11 // pred_fallthru
          _
        // Predicated region
        $region29: #{tpu_custom_call.1} parent=11 // pred_check
          %p221 = pneg %p148
        $region30: #{tpu_custom_call.1} parent=11 // pred_check_branch
          %223 = sbr.rel (%p221) target = $region32
        $region31: #{tpu_custom_call.1} parent=11 // pred_region
          _
        $region32: #{tpu_custom_call.1} parent=11 // pred_fallthru
          _
      $region12: #{tpu_custom_call.1} parent=5 // pred_fallthru
        _
      %p224 = scmp.lt.s32.totalorder %s17, 3
      // Predicated region
      $region33: #{tpu_custom_call.1} parent=5 // pred_check
        %p225 = pneg %p224
      $region34: #{tpu_custom_call.1} parent=5 // pred_check_branch
        %227 = sbr.rel (%p225) target = $region36
      $region35: #{tpu_custom_call.1} parent=5 // pred_region
        // Predicated region
        $region37: #{tpu_custom_call.1} parent=35 // pred_check
          %p228 = pneg %p37
        $region38: #{tpu_custom_call.1} parent=35 // pred_check_branch
          %230 = sbr.rel (%p228) target = $region40
        $region39: #{tpu_custom_call.1} parent=35 // pred_region
          %p231 = scmp.lt.s32.totalorder %s17, 2
          %s232 = scalar_select %p231, %s17, 2
          %s233 = smul.addr %s232, 8
          %s234 = scalar_lea.vmem %s0, %s233
        $region40: #{tpu_custom_call.1} parent=35 // pred_fallthru
          _
      $region36: #{tpu_custom_call.1} parent=5 // pred_fallthru
        _
      %p235 = scmp.le.s32.totalorder 1, %s17
      %p236 = scmp.lt.s32.totalorder %s17, 4
      %p237 = pnand %p235, %p236
      %p238 = pneg %p237
      // Predicated region
      $region41: #{tpu_custom_call.1} parent=5 // pred_check
        _
      $region42: #{tpu_custom_call.1} parent=5 // pred_check_branch
        %240 = sbr.rel (%p237) target = $region44
      $region43: #{tpu_custom_call.1} parent=5 // pred_region
        %s241 = ssub.s32 %s17, 1
        // Predicated region
        $region45: #{tpu_custom_call.1} parent=43 // pred_check
          %p242 = pneg %p85
        $region46: #{tpu_custom_call.1} parent=43 // pred_check_branch
          %244 = sbr.rel (%p242) target = $region48
        $region47: #{tpu_custom_call.1} parent=43 // pred_region
          %245 = dma.done [#allocation3], 1024
        $region48: #{tpu_custom_call.1} parent=43 // pred_fallthru
          _
        // Predicated region
        $region49: #{tpu_custom_call.1} parent=43 // pred_check
          %p246 = pneg %p127
        $region50: #{tpu_custom_call.1} parent=43 // pred_check_branch
          %248 = sbr.rel (%p246) target = $region52
        $region51: #{tpu_custom_call.1} parent=43 // pred_region
          %249 = dma.done [#allocation6], 1024
        $region52: #{tpu_custom_call.1} parent=43 // pred_fallthru
          _
        %p250 = scmp.lt.s32.totalorder %s22, 2
        %s251 = scalar_select %p250, %s22, 2
        %s252 = smul.addr %s251, 8
        %s253 = scalar_lea.vmem %s0, %s252
        %p254 = pneg %p43
        %p255 = pneg %p40
        %p256 = pneg %p64
        %p257 = pneg %p61
        %p258 = pneg %p85
        %p259 = pneg %p82
        %p260 = pneg %p106
        %p261 = pneg %p103
        %p262 = pneg %p127
        %p263 = pneg %p124
        %p264 = pneg %p148
        %p265 = pneg %p145
        %p266 = pneg %p174
        %p267 = pneg %p171
        %s268 = sand.u32 %s161, 1
        %s269 = scalar_lea.sflag [#allocation4], %s268
        %s270 = sand.u32 %s161, 1
        %s271 = smul.addr %s270, 8
        %s272 = scalar_lea.vmem [#allocation7], %s271
        %p273 = scmp.lt.s32.totalorder %s22, 2
        %s274 = scalar_select %p273, %s22, 2
        %s275 = smul.addr %s274, 8
        %s276 = scalar_lea.vmem %s0, %s275
        %v278 = vld [vmem:[%s276] sm:$0xff]
        %v279 = vlaneseq
        %v280 = vand.u32 %v279, 127
        %281 = vset.pattern.permute.xlu0 0
        %282 = vperm.xlu0 %281, %v278
        %v283 = vpop.permute.xlu0 %282
        %vm284 = vcmp.eq.s32.totalorder %v280, %v283
        %v285 = vsel %vm284, 1, 0
        %v286 = vcvt.s32.f32 %v285
        %v287 = vadd.f32 %v286, 0.0
        %288 = vset.pattern.permute.xlu0 1
        %289 = vperm.xlu0 %288, %v278
        %v290 = vpop.permute.xlu0 %289
        %vm291 = vcmp.eq.s32.totalorder %v280, %v290
        %v292 = vsel %vm291, 1, 0
        %v293 = vcvt.s32.f32 %v292
        %v294 = vadd.f32 %v287, %v293
        %295 = vset.pattern.permute.xlu0 2
        %296 = vperm.xlu0 %295, %v278
        %v297 = vpop.permute.xlu0 %296
        %vm298 = vcmp.eq.s32.totalorder %v280, %v297
        %v299 = vsel %vm298, 1, 0
        %v300 = vcvt.s32.f32 %v299
        %v301 = vadd.f32 %v294, %v300
        %v302 = vpack.c.bf16 %v301, %v301
        %v303 = vld [vmem:[%s1] sm:$0xf]
        %v304 = vld [vmem:[%s1 + $0x4] sm:$0xf]
        %v307 = vunpack.c.l.b16 %v303
        %v308 = vunpack.c.l.b16 %v304
        %v309 = vpack.c.b16 %v308, %v307
        %vm311 = vcmask 130048
        %v313 = vsel %vm311, %v302, 0
        %315 = vmatprep.subr.bf16.mxu0 0
        %316 = vmatpush1.bf16.msra.mxu0 0
        %317 = vmatprep.subr.bf16.mxu0 0
        %318 = vmatpush1.bf16.msra.mxu0 0
        %319 = vmatprep.subr.bf16.mxu0 0
        %320 = vmatpush1.bf16.msra.mxu0 0
        %321 = vmatprep.subr.bf16.mxu0 0
        %322 = vmatpush1.bf16.msra.mxu0 0
        %323 = vmatprep.subr.bf16.mxu0 0
        %324 = vmatpush1.bf16.msra.mxu0 0
        %325 = vmatprep.subr.bf16.mxu0 0
        %326 = vmatpush1.bf16.msra.mxu0 0
        %327 = vmatprep.subr.bf16.mxu0 0
        %328 = vmatpush1.bf16.msra.mxu0 0
        %329 = vmatprep.subr.bf16.mxu0 0
        %330 = vmatpush1.bf16.msra.mxu0 %v309
        %331 = vmatprep.subr.bf16.mxu0 0
        %332 = vmatpush2.bf16.msra.mxu0 0
        %333 = vmatprep.subr.bf16.mxu0 0
        %334 = vmatpush2.bf16.msra.mxu0 0
        %335 = vmatprep.subr.bf16.mxu0 0
        %336 = vmatpush2.bf16.msra.mxu0 0
        %337 = vmatprep.subr.bf16.mxu0 0
        %338 = vmatpush2.bf16.msra.mxu0 0
        %339 = vmatprep.subr.bf16.mxu0 0
        %340 = vmatpush2.bf16.msra.mxu0 0
        %341 = vmatprep.subr.bf16.mxu0 0
        %342 = vmatpush2.bf16.msra.mxu0 0
        %343 = vmatprep.subr.bf16.mxu0 0
        %344 = vmatpush2.bf16.msra.mxu0 0
        %345 = vmatprep.subr.bf16.mxu0 0
        %346 = vmatpush2.bf16.msra.mxu0 0
        %347 = vmatprep.mubr.bf16.mxu0 0
        %348 = vmatmul.mubr.bf16.gmra.mxu0 %v313
        %v349 = vpop.f32.mrf.mxu0
        %v350 = vadd.f32 0.0, %v349
        %v351 = vpop.f32.mrf.mxu0
        %v352 = vpop.f32.mrf.mxu0
        %v353 = vpop.f32.mrf.mxu0
        %354 = vdwg.mxu0
        %v355 = vpack.c.bf16 %v350, %v350
        %v356 = vld [vmem:[#allocation2] sm:$0xf]
        %v357 = vld [vmem:[#allocation2 + $0x4] sm:$0xf]
        %v358 = vld [vmem:[#allocation2 + $0x8] sm:$0xf]
        %v359 = vld [vmem:[#allocation2 + $0xc] sm:$0xf]
        %v360 = vld [vmem:[#allocation2 + $0x10] sm:$0xf]
        %v361 = vld [vmem:[#allocation2 + $0x14] sm:$0xf]
        %v362 = vld [vmem:[#allocation2 + $0x18] sm:$0xf]
        %v363 = vld [vmem:[#allocation2 + $0x1c] sm:$0xf]
        %v364 = vld [vmem:[#allocation2 + $0x20] sm:$0xf]
        %v365 = vld [vmem:[#allocation2 + $0x24] sm:$0xf]
        %v366 = vld [vmem:[#allocation2 + $0x28] sm:$0xf]
        %v367 = vld [vmem:[#allocation2 + $0x2c] sm:$0xf]
        %v368 = vld [vmem:[#allocation2 + $0x30] sm:$0xf]
        %v369 = vld [vmem:[#allocation2 + $0x34] sm:$0xf]
        %v370 = vld [vmem:[#allocation2 + $0x38] sm:$0xf]
        %v371 = vld [vmem:[#allocation2 + $0x3c] sm:$0xf]
        %v372 = vld [vmem:[%s3] sm:$0x1]
        %v374 = vlaneseq
        %v375 = vshrl.u32 %v374, 7
        %v376 = vsub.s32 0, %v375
        %v377 = vrot.slane %v372, %v376
        %v395 = vunpack.c.l.b16 %v356
        %v396 = vunpack.c.l.b16 %v357
        %v397 = vunpack.c.l.b16 %v358
        %v398 = vunpack.c.l.b16 %v359
        %v399 = vunpack.c.l.b16 %v360
        %v400 = vunpack.c.l.b16 %v361
        %v401 = vunpack.c.l.b16 %v362
        %v402 = vunpack.c.l.b16 %v363
        %v403 = vunpack.c.l.b16 %v364
        %v404 = vunpack.c.l.b16 %v365
        %v405 = vunpack.c.l.b16 %v366
        %v406 = vunpack.c.l.b16 %v367
        %v407 = vunpack.c.l.b16 %v368
        %v408 = vunpack.c.l.b16 %v369
        %v409 = vunpack.c.l.b16 %v370
        %v410 = vunpack.c.l.b16 %v371
        %v411 = vpack.c.b16 %v396, %v395
        %v412 = vpack.c.b16 %v398, %v397
        %v413 = vpack.c.b16 %v400, %v399
        %v414 = vpack.c.b16 %v402, %v401
        %v415 = vpack.c.b16 %v404, %v403
        %v416 = vpack.c.b16 %v406, %v405
        %v417 = vpack.c.b16 %v408, %v407
        %v418 = vpack.c.b16 %v410, %v409
        %427 = vmatprep.subr.bf16.mxu0 0
        %428 = vmatpush1.bf16.msra.mxu0 %v418
        %429 = vmatprep.subr.bf16.mxu0 0
        %430 = vmatpush1.bf16.msra.mxu0 %v417
        %431 = vmatprep.subr.bf16.mxu0 0
        %432 = vmatpush1.bf16.msra.mxu0 %v416
        %433 = vmatprep.subr.bf16.mxu0 0
        %434 = vmatpush1.bf16.msra.mxu0 %v415
        %435 = vmatprep.subr.bf16.mxu0 0
        %436 = vmatpush1.bf16.msra.mxu0 %v414
        %437 = vmatprep.subr.bf16.mxu0 0
        %438 = vmatpush1.bf16.msra.mxu0 %v413
        %439 = vmatprep.subr.bf16.mxu0 0
        %440 = vmatpush1.bf16.msra.mxu0 %v412
        %441 = vmatprep.subr.bf16.mxu0 0
        %442 = vmatpush1.bf16.msra.mxu0 %v411
        %443 = vmatprep.subr.bf16.mxu0 0
        %444 = vmatpush2.bf16.msra.mxu0 0
        %445 = vmatprep.subr.bf16.mxu0 0
        %446 = vmatpush2.bf16.msra.mxu0 0
        %447 = vmatprep.subr.bf16.mxu0 0
        %448 = vmatpush2.bf16.msra.mxu0 0
        %449 = vmatprep.subr.bf16.mxu0 0
        %450 = vmatpush2.bf16.msra.mxu0 0
        %451 = vmatprep.subr.bf16.mxu0 0
        %452 = vmatpush2.bf16.msra.mxu0 0
        %453 = vmatprep.subr.bf16.mxu0 0
        %454 = vmatpush2.bf16.msra.mxu0 0
        %455 = vmatprep.subr.bf16.mxu0 0
        %456 = vmatpush2.bf16.msra.mxu0 0
        %457 = vmatprep.subr.bf16.mxu0 0
        %458 = vmatpush2.bf16.msra.mxu0 0
        %459 = vmatprep.mubr.bf16.mxu0 0
        %460 = vmatmul.mubr.bf16.gmra.mxu0 %v355
        %v461 = vpop.f32.mrf.mxu0
        %v462 = vadd.f32 %v377, %v461
        %v463 = vpop.f32.mrf.mxu0
        %v464 = vpop.f32.mrf.mxu0
        %v465 = vpop.f32.mrf.mxu0
        %466 = vdwg.mxu0
        %v467 = vmax.f32 %v462, 0.0
        %v468 = vpack.c.bf16 %v467, %v467
        %v469 = vld [vmem:[#allocation5] sm:$0xf]
        %v470 = vld [vmem:[#allocation5 + $0x4] sm:$0xf]
        %v471 = vld [vmem:[#allocation5 + $0x8] sm:$0xf]
        %v472 = vld [vmem:[#allocation5 + $0xc] sm:$0xf]
        %v473 = vld [vmem:[#allocation5 + $0x10] sm:$0xf]
        %v474 = vld [vmem:[#allocation5 + $0x14] sm:$0xf]
        %v475 = vld [vmem:[#allocation5 + $0x18] sm:$0xf]
        %v476 = vld [vmem:[#allocation5 + $0x1c] sm:$0xf]
        %v477 = vld [vmem:[#allocation5 + $0x20] sm:$0xf]
        %v478 = vld [vmem:[#allocation5 + $0x24] sm:$0xf]
        %v479 = vld [vmem:[#allocation5 + $0x28] sm:$0xf]
        %v480 = vld [vmem:[#allocation5 + $0x2c] sm:$0xf]
        %v481 = vld [vmem:[#allocation5 + $0x30] sm:$0xf]
        %v482 = vld [vmem:[#allocation5 + $0x34] sm:$0xf]
        %v483 = vld [vmem:[#allocation5 + $0x38] sm:$0xf]
        %v484 = vld [vmem:[#allocation5 + $0x3c] sm:$0xf]
        %v485 = vld [vmem:[%s5] sm:$0x1]
        %v487 = vlaneseq
        %v488 = vshrl.u32 %v487, 7
        %v489 = vsub.s32 0, %v488
        %v490 = vrot.slane %v485, %v489
        %v508 = vunpack.c.l.b16 %v469
        %v509 = vunpack.c.l.b16 %v470
        %v510 = vunpack.c.l.b16 %v471
        %v511 = vunpack.c.l.b16 %v472
        %v512 = vunpack.c.l.b16 %v473
        %v513 = vunpack.c.l.b16 %v474
        %v514 = vunpack.c.l.b16 %v475
        %v515 = vunpack.c.l.b16 %v476
        %v516 = vunpack.c.l.b16 %v477
        %v517 = vunpack.c.l.b16 %v478
        %v518 = vunpack.c.l.b16 %v479
        %v519 = vunpack.c.l.b16 %v480
        %v520 = vunpack.c.l.b16 %v481
        %v521 = vunpack.c.l.b16 %v482
        %v522 = vunpack.c.l.b16 %v483
        %v523 = vunpack.c.l.b16 %v484
        %v524 = vpack.c.b16 %v509, %v508
        %v525 = vpack.c.b16 %v511, %v510
        %v526 = vpack.c.b16 %v513, %v512
        %v527 = vpack.c.b16 %v515, %v514
        %v528 = vpack.c.b16 %v517, %v516
        %v529 = vpack.c.b16 %v519, %v518
        %v530 = vpack.c.b16 %v521, %v520
        %v531 = vpack.c.b16 %v523, %v522
        %540 = vmatprep.subr.bf16.mxu0 0
        %541 = vmatpush1.bf16.msra.mxu0 %v531
        %542 = vmatprep.subr.bf16.mxu0 0
        %543 = vmatpush1.bf16.msra.mxu0 %v530
        %544 = vmatprep.subr.bf16.mxu0 0
        %545 = vmatpush1.bf16.msra.mxu0 %v529
        %546 = vmatprep.subr.bf16.mxu0 0
        %547 = vmatpush1.bf16.msra.mxu0 %v528
        %548 = vmatprep.subr.bf16.mxu0 0
        %549 = vmatpush1.bf16.msra.mxu0 %v527
        %550 = vmatprep.subr.bf16.mxu0 0
        %551 = vmatpush1.bf16.msra.mxu0 %v526
        %552 = vmatprep.subr.bf16.mxu0 0
        %553 = vmatpush1.bf16.msra.mxu0 %v525
        %554 = vmatprep.subr.bf16.mxu0 0
        %555 = vmatpush1.bf16.msra.mxu0 %v524
        %556 = vmatprep.subr.bf16.mxu0 0
        %557 = vmatpush2.bf16.msra.mxu0 0
        %558 = vmatprep.subr.bf16.mxu0 0
        %559 = vmatpush2.bf16.msra.mxu0 0
        %560 = vmatprep.subr.bf16.mxu0 0
        %561 = vmatpush2.bf16.msra.mxu0 0
        %562 = vmatprep.subr.bf16.mxu0 0
        %563 = vmatpush2.bf16.msra.mxu0 0
        %564 = vmatprep.subr.bf16.mxu0 0
        %565 = vmatpush2.bf16.msra.mxu0 0
        %566 = vmatprep.subr.bf16.mxu0 0
        %567 = vmatpush2.bf16.msra.mxu0 0
        %568 = vmatprep.subr.bf16.mxu0 0
        %569 = vmatpush2.bf16.msra.mxu0 0
        %570 = vmatprep.subr.bf16.mxu0 0
        %571 = vmatpush2.bf16.msra.mxu0 0
        %572 = vmatprep.mubr.bf16.mxu0 0
        %573 = vmatmul.mubr.bf16.gmra.mxu0 %v468
        %v574 = vpop.f32.mrf.mxu0
        %v575 = vadd.f32 %v490, %v574
        %v576 = vpop.f32.mrf.mxu0
        %v577 = vpop.f32.mrf.mxu0
        %v578 = vpop.f32.mrf.mxu0
        %579 = vdwg.mxu0
        %580 = vst [vmem:[%s272] sm:$0xff] %v575
        %s581 = sand.u32 %s161, 1
        %s582 = scalar_lea.sflag [#allocation4], %s581
        %s583 = sand.u32 %s161, 1
        %s584 = smul.addr %s583, 8
        %s585 = scalar_lea.vmem [#allocation7], %s584
        // Predicated region
        $region53: #{tpu_custom_call.1} parent=43 // pred_check
          %p586 = pneg %p171
        $region54: #{tpu_custom_call.1} parent=43 // pred_check_branch
          %588 = sbr.rel (%p586) target = $region56
        $region55: #{tpu_custom_call.1} parent=43 // pred_region
          %s590 = ssub.s32 128, 128
          %591 = vsyncadd %s582, %s590
          %s592 = smul.addr %s22, 128
          %s593 = scalar_lea.hbm %s6, %s592
          %s595 = sshll.u32 %s585, 4
          %s596 = int_to_ptr.vmem [resolvable:$true] %s595
          %598 = dma.vmem_to_hbm [thread:$0]  %s596, 128, %s593, %s582
        $region56: #{tpu_custom_call.1} parent=43 // pred_fallthru
          _
      $region44: #{tpu_custom_call.1} parent=5 // pred_fallthru
        _
      %p599 = scmp.le.s32.totalorder 2, %s17
      // Predicated region
      $region57: #{tpu_custom_call.1} parent=5 // pred_check
        %p600 = pneg %p599
      $region58: #{tpu_custom_call.1} parent=5 // pred_check_branch
        %602 = sbr.rel (%p600) target = $region60
      $region59: #{tpu_custom_call.1} parent=5 // pred_region
        %s603 = ssub.s32 %s17, 2
        // Predicated region
        $region61: #{tpu_custom_call.1} parent=59 // pred_check
          %p604 = pneg %p177
        $region62: #{tpu_custom_call.1} parent=59 // pred_check_branch
          %606 = sbr.rel (%p604) target = $region64
        $region63: #{tpu_custom_call.1} parent=59 // pred_region
          %s607 = sand.u32 %s162, 1
          %s608 = scalar_lea.sflag [#allocation4], %s607
          %s609 = sand.u32 %s162, 1
          %s610 = smul.addr %s609, 8
          %s611 = scalar_lea.vmem [#allocation7], %s610
          %612 = dma.done %s608, 128
        $region64: #{tpu_custom_call.1} parent=59 // pred_fallthru
          _
      $region60: #{tpu_custom_call.1} parent=5 // pred_fallthru
        _
    $region6: #{tpu_custom_call.1} parent=1 // loop_footer
      %s21 = sadd.s32 1, %s17
    $region7: #{tpu_custom_call.1} parent=1 // loop_footer_branch
      %16 = sbr.rel target = $region3
    $region8: #{tpu_custom_call.1} parent=1 // loop_exit
      _
    %613 = vsyncpa [#allocation3], 1
    %s614 = scalar_lea.sflag [#allocation3], 1
    %615 = vsyncpa %s614, 1
    %616 = vsyncpa [#allocation6], 1
    %617 = vsyncpa [#allocation4], 1
    %s618 = scalar_lea.sflag [#allocation4], 1
    %619 = vsyncpa %s618, 1

</llo_original>
